<compile_context>
chip_gen: v7x
topology: tpu7x:2x2x1
jax: 0.10.0
libtpu: 0.0.40
codegen_flags: <defaults>
</compile_context>

<pallas_src>
import functools

import jax
import jax.numpy as jnp
from jax.experimental import pallas as pl
from jax.experimental.pallas import tpu as pltpu

# ----------------------------- configuration -------------------------------
CFG = dict(
    image=16,    # ScalingLayer resize target (224 in the real model; small here)
    patch=8,     # patch size
    hidden=32,   # hidden_size
    heads=4,     # attention heads
    inter=64,    # MLP intermediate size
    layers=2,    # encoder layers
)
OPENAI_MEAN = jnp.array([0.48145466, 0.4578275, 0.40821073], jnp.float32)
OPENAI_STD = jnp.array([0.26862954, 0.26130258, 0.27577711], jnp.float32)
LN_EPS = 1e-5


# ------------------------------- kernels ------------------------------------
def _ln_f32(x, g, b):
    """LayerNorm over the last dim in f32; g, b are (1, D)."""
    mean = jnp.mean(x, axis=-1, keepdims=True)
    xc = x - mean
    var = jnp.mean(xc * xc, axis=-1, keepdims=True)
    return xc * jax.lax.rsqrt(var + LN_EPS) * g + b


def _embed_kernel(p_ref, w_ref, add_ref, g_ref, b_ref, o_ref):
    # p_ref: (1, S, CPP) im2col patches (row 0 zeros -> CLS slot),
    # w_ref: (CPP, D) bf16 scaling-folded conv weight,
    # add_ref: (S, D) = pos_emb + [class_emb ; folded conv bias],
    # g/b: pre_layrnorm params (1, D).
    f32 = jnp.float32
    p = p_ref[0].astype(jnp.bfloat16)
    h = jnp.dot(p, w_ref[...], preferred_element_type=f32) + add_ref[...]
    o_ref[0] = _ln_f32(h, g_ref[...], b_ref[...]).astype(o_ref.dtype)


def _encoder_kernel(h_ref, vecs_ref, qkvw_ref, qkvb_ref, ow_ref,
                    f1w_ref, f1b_ref, f2w_ref, o_ref, acc_ref, *, nh):
    """One CLIP encoder layer per grid step; grid = (B, L), L innermost.

    The residual stream for the current image stays resident in acc_ref
    (VMEM, f32) across all L steps and is stored to HBM only on the last one.
    """
    f32, bf16 = jnp.float32, jnp.bfloat16
    l = pl.program_id(1)
    D = h_ref.shape[2]
    hd = D // nh

    @pl.when(l == 0)
    def _():                                   # load this image's hidden state
        acc_ref[...] = h_ref[0].astype(f32)

    h = acc_ref[...]                           # (S, D) f32, resident

    vecs = vecs_ref[0]                         # (6, D) f32 packed small params
    ln1_g, ln1_b = vecs[0:1], vecs[1:2]
    ln2_g, ln2_b = vecs[2:3], vecs[3:4]
    o_b, f2_b = vecs[4:5], vecs[5:6]

    # ---- self attention (pre-LN) ----
    x = _ln_f32(h, ln1_g, ln1_b)
    # Fused QKV: one full-width MXU matmul; 1/sqrt(hd) already folded into q.
    qkv = jnp.dot(x.astype(bf16), qkvw_ref[0],
                  preferred_element_type=f32) + qkvb_ref[0]        # (S, 3D)

    heads = []
    # nh is tiny here; at real head counts move heads to the grid / batched dot.
    for hh in range(nh):
        q_h = qkv[:, hh * hd:(hh + 1) * hd]
        k_h = qkv[:, D + hh * hd:D + (hh + 1) * hd]
        v_h = qkv[:, 2 * D + hh * hd:2 * D + (hh + 1) * hd]
        # scores = q @ k^T via transposed-RHS contraction (no in-kernel k.T)
        s = jax.lax.dot_general(q_h.astype(bf16), k_h.astype(bf16),
                                (((1,), (1,)), ((), ())),
                                preferred_element_type=f32)        # (S, S)
        s = s - jnp.max(s, axis=-1, keepdims=True)
        p = jnp.exp(s)
        p = p * pl.reciprocal(jnp.sum(p, axis=-1, keepdims=True), approx=True)
        heads.append(jnp.dot(p.astype(bf16), v_h.astype(bf16),
                             preferred_element_type=f32))          # (S, hd)

    ctx = jnp.concatenate(heads, axis=-1)                          # (S, D)
    attn = jnp.dot(ctx.astype(bf16), ow_ref[0],
                   preferred_element_type=f32) + o_b               # (S, D)
    h = h + attn                                                   # residual 1

    # ---- MLP (pre-LN, quick_gelu) ----
    x2 = _ln_f32(h, ln2_g, ln2_b)
    f = jnp.dot(x2.astype(bf16), f1w_ref[0],
                preferred_element_type=f32) + f1b_ref[0]           # (S, I)
    f = f * jax.nn.sigmoid(1.702 * f)
    m = jnp.dot(f.astype(bf16), f2w_ref[0],
                preferred_element_type=f32) + f2_b                 # (S, D)
    acc_ref[...] = h + m                                           # residual 2

    @pl.when(l == pl.num_programs(1) - 1)
    def _():
        o_ref[0] = acc_ref[...].astype(o_ref.dtype)


# ------------------------------- forward -------------------------------------
def clip_vision_tower_forward(images, semantic_feat, packed):
    P, D, nh, I, L = (CFG["patch"], CFG["hidden"], CFG["heads"],
                      CFG["inter"], CFG["layers"])
    B, C, Hin, Win = images.shape
    Ht = Wt = CFG["image"]
    nH = nW = Ht // P
    nP = nH * nW
    S = nP + 1
    CPP = C * P * P

    # --- ScalingLayer: only the nearest-neighbor resize remains (pure gather);
    #     the affine part is folded into the patch-embed weights in pack_params.
    # TODO(synk): torch's runtime `assert inp.max() < 10` is host-side, skipped.
    ri = (jnp.arange(Ht) * Hin) // Ht
    ci = (jnp.arange(Wt) * Win) // Wt
    x = images[:, :, ri[:, None], ci[None, :]]                     # (B, C, Ht, Wt)

    # im2col; prepend a zero row so the CLS slot is produced purely by add_mat
    patches = (x.reshape(B, C, nH, P, nW, P)
                 .transpose(0, 2, 4, 1, 3, 5)
                 .reshape(B, nP, CPP))
    patches = jnp.pad(patches, ((0, 0), (1, 0), (0, 0)))           # (B, S, CPP)

    # --- embeddings + pre_layrnorm: one kernel, grid over batch ---
    h = pl.pallas_call(
        _embed_kernel,
        out_shape=jax.ShapeDtypeStruct((B, S, D), jnp.float32),
        grid=(B,),
        in_specs=[pl.BlockSpec((1, S, CPP), lambda b: (b, 0, 0)),
                  pl.BlockSpec((CPP, D), lambda b: (0, 0)),
                  pl.BlockSpec((S, D), lambda b: (0, 0)),
                  pl.BlockSpec((1, D), lambda b: (0, 0)),
                  pl.BlockSpec((1, D), lambda b: (0, 0))],
        out_specs=pl.BlockSpec((1, S, D), lambda b: (b, 0, 0)),
        compiler_params=pltpu.CompilerParams(dimension_semantics=("parallel",)),
    )(patches, packed["patch_w"], packed["add_mat"],
      packed["pre_ln_g"], packed["pre_ln_b"])

    # --- encoder: ALL layers in one pallas_call, grid=(B, L), L innermost ---
    enc = packed["enc"]
    lmap = lambda b, l: (l, 0, 0)
    h = pl.pallas_call(
        functools.partial(_encoder_kernel, nh=nh),
        out_shape=jax.ShapeDtypeStruct((B, S, D), jnp.float32),
        grid=(B, L),
        in_specs=[pl.BlockSpec((1, S, D), lambda b, l: (b, 0, 0)),
                  pl.BlockSpec((1, 6, D), lmap),          # packed LN/bias vecs
                  pl.BlockSpec((1, D, 3 * D), lmap),      # fused QKV weight
                  pl.BlockSpec((1, 1, 3 * D), lmap),      # fused QKV bias
                  pl.BlockSpec((1, D, D), lmap),          # out proj weight
                  pl.BlockSpec((1, D, I), lmap),          # fc1 weight
                  pl.BlockSpec((1, 1, I), lmap),          # fc1 bias
                  pl.BlockSpec((1, I, D), lmap)],         # fc2 weight
        out_specs=pl.BlockSpec((1, S, D), lambda b, l: (b, 0, 0)),
        scratch_shapes=[pltpu.VMEM((S, D), jnp.float32)],
        compiler_params=pltpu.CompilerParams(
            dimension_semantics=("parallel", "arbitrary")),
    )(h, enc["vecs"], enc["qkv_w"], enc["qkv_b"], enc["o_w"],
      enc["fc1_w"], enc["fc1_b"], enc["fc2_w"])

    # feature_select: hidden_states[-1][:, :1] ('cls'), then .squeeze()
    visual = h[:, 0, :]                                    # (B, D)
    sem = semantic_feat[:, 0, :]                           # (B, D)

    # --- InfoNCE head in plain jnp (tiny (B,B) work; .detach() is a fwd no-op).
    v_n = visual * jax.lax.rsqrt(jnp.sum(visual * visual, axis=-1, keepdims=True))
    s_n = sem * jax.lax.rsqrt(jnp.sum(sem * sem, axis=-1, keepdims=True))
    sim = s_n @ v_n.T                                      # (B, B)
    # -(diag(exp(sim)) / sum_j exp(sim)).log().mean()  (log-space, stable)
    loss = jnp.mean(jax.nn.logsumexp(sim, axis=1) - jnp.diagonal(sim))
    return loss


# ------------------------------- parameters ----------------------------------
def init_params(key):
    """PyTorch-layout synthetic CLIP vision weights."""
    D, P, I, L = CFG["hidden"], CFG["patch"], CFG["inter"], CFG["layers"]
    C = 3
    num_pos = (CFG["image"] // P) ** 2 + 1

    def nrm(k, shape, scale=0.02):
        return scale * jax.random.normal(k, shape, dtype=jnp.float32)

    ks = iter(jax.random.split(key, 3 + 12 * L))
    params = {
        "patch_w": nrm(next(ks), (C * P * P, D)),   # conv weight reshaped to (in, out)
        "class_emb": nrm(next(ks), (D,)),
        "pos_emb": nrm(next(ks), (num_pos, D)),
        "pre_ln_g": jnp.ones((D,), jnp.float32),
        "pre_ln_b": jnp.zeros((D,), jnp.float32),
        "layers": [],
    }
    for _ in range(L):
        lp = {
            "ln1_g": jnp.ones((D,), jnp.float32), "ln1_b": jnp.zeros((D,), jnp.float32),
            "q_w": nrm(next(ks), (D, D)), "q_b": nrm(next(ks), (D,)),
            "k_w": nrm(next(ks), (D, D)), "k_b": nrm(next(ks), (D,)),
            "v_w": nrm(next(ks), (D, D)), "v_b": nrm(next(ks), (D,)),
            "o_w": nrm(next(ks), (D, D)), "o_b": nrm(next(ks), (D,)),
            "ln2_g": jnp.ones((D,), jnp.float32), "ln2_b": jnp.zeros((D,), jnp.float32),
            "fc1_w": nrm(next(ks), (D, I)), "fc1_b": nrm(next(ks), (I,)),
            "fc2_w": nrm(next(ks), (I, D)), "fc2_b": nrm(next(ks), (D,)),
        }
        params["layers"].append(lp)
    return params


def pack_params(params):
    """One-time offline repack:
       * fold ScalingLayer affine into the patch conv,
       * fuse q/k/v into one (D,3D) weight with the 1/sqrt(hd) scale folded in,
       * stack per-layer weights along a leading L dim for the (B,L) grid,
       * pack the small LN/bias vectors into one (L,6,D) array,
       * store all matmul weights in bf16 (f32 accumulation in-kernel)."""
    D, P, nh, I = CFG["hidden"], CFG["patch"], CFG["heads"], CFG["inter"]
    hd = D // nh
    scale = hd ** -0.5
    nP = (CFG["image"] // P) ** 2

    # ScalingLayer: x*0.5 + 0.5 ; (x' - mean)/std  ==  x*s + t  (per channel)
    s_vec = jnp.repeat(0.5 / OPENAI_STD, P * P)              # channel-major (C,P,P)
    t_vec = jnp.repeat((0.5 - OPENAI_MEAN) / OPENAI_STD, P * P)
    w_eff = s_vec[:, None] * params["patch_w"]               # (C*P*P, D)
    b_eff = t_vec @ params["patch_w"]                        # (D,)
    add_mat = params["pos_emb"] + jnp.concatenate(
        [params["class_emb"][None, :], jnp.broadcast_to(b_eff, (nP, D))], axis=0)

    layers = params["layers"]

    def stack(fn):
        return jnp.stack([fn(lp) for lp in layers], axis=0)

    enc = {
        # rows: ln1_g, ln1_b, ln2_g, ln2_b, o_b, fc2_b
        "vecs": stack(lambda lp: jnp.stack(
            [lp["ln1_g"], lp["ln1_b"], lp["ln2_g"], lp["ln2_b"],
             lp["o_b"], lp["fc2_b"]], axis=0)),                                  # (L,6,D) f32
        "qkv_w": stack(lambda lp: jnp.concatenate(
            [lp["q_w"] * scale, lp["k_w"], lp["v_w"]], axis=1)
        ).astype(jnp.bfloat16),                                                  # (L,D,3D)
        "qkv_b": stack(lambda lp: jnp.concatenate(
            [lp["q_b"] * scale, lp["k_b"], lp["v_b"]])[None, :]),                # (L,1,3D) f32
        "o_w": stack(lambda lp: lp["o_w"]).astype(jnp.bfloat16),                 # (L,D,D)
        "fc1_w": stack(lambda lp: lp["fc1_w"]).astype(jnp.bfloat16),             # (L,D,I)
        "fc1_b": stack(lambda lp: lp["fc1_b"][None, :]),                         # (L,1,I) f32
        "fc2_w": stack(lambda lp: lp["fc2_w"]).astype(jnp.bfloat16),             # (L,I,D)
    }
    return {
        "patch_w": w_eff.astype(jnp.bfloat16),
        "add_mat": add_mat,
        "pre_ln_g": params["pre_ln_g"].reshape(1, D),
        "pre_ln_b": params["pre_ln_b"].reshape(1, D),
        "enc": enc,
    }


# --------------------------------- main ---------------------------------------
if __name__ == "__main__":
    key = jax.random.PRNGKey(0)
    k_img, k_sem, k_par = jax.random.split(key, 3)

    # images: (B=2, C=3, H=12, W=12) NCHW (ScalingLayer resizes to CFG['image']^2)
    images = 0.1 * jax.random.normal(k_img, (2, 3, 12, 12), jnp.float32)
    # semantic_feat: (B=2, seq=8, hidden=32); only [:, :1] is used
    semantic_feat = jax.random.normal(k_sem, (2, 8, CFG["hidden"]), jnp.float32)

    params = init_params(k_par)
    packed = pack_params(params)    # offline repack: not in the jitted hot path

    loss = jax.jit(clip_vision_tower_forward)(images, semantic_feat, packed)
    jax.block_until_ready(loss)
    assert loss.shape == () and bool(jnp.isfinite(loss))
    print("KERNEL_OK")
</pallas_src>

<mosaic_0001>
module attributes {stable_mosaic.version = 11 : i64} {
  func.func @_embed_kernel(%arg0: i32, %arg1: memref<1x5x192xf32, #tpu.memory_space<vmem>>, %arg2: memref<192x32xbf16, #tpu.memory_space<vmem>>, %arg3: memref<5x32xf32, #tpu.memory_space<vmem>>, %arg4: memref<1x32xf32, #tpu.memory_space<vmem>>, %arg5: memref<1x32xf32, #tpu.memory_space<vmem>>, %arg6: memref<1x5x32xf32, #tpu.memory_space<vmem>>) attributes {dimension_semantics = [#tpu.dimension_semantics<parallel>], iteration_bounds = array<i64: 2>, scalar_prefetch = 0 : i64, scratch_operands = 0 : i64, tpu.core_type = #tpu.core_type<tc>, window_params = [{transform_indices = @transform_0, window_bounds = array<i64: 1, 5, 192>}, {pipeline_mode = #tpu.pipeline_mode<synchronous>, transform_indices = @transform_1, window_bounds = array<i64: 192, 32>}, {pipeline_mode = #tpu.pipeline_mode<synchronous>, transform_indices = @transform_2, window_bounds = array<i64: 5, 32>}, {pipeline_mode = #tpu.pipeline_mode<synchronous>, transform_indices = @transform_3, window_bounds = array<i64: 1, 32>}, {pipeline_mode = #tpu.pipeline_mode<synchronous>, transform_indices = @transform_4, window_bounds = array<i64: 1, 32>}, {transform_indices = @transform_5, window_bounds = array<i64: 1, 5, 32>}]} {
    %c0 = arith.constant 0 : index
    %c0_0 = arith.constant 0 : index
    %c0_1 = arith.constant 0 : index
    %0 = vector.load %arg1[%c0, %c0_0, %c0_1] : memref<1x5x192xf32, #tpu.memory_space<vmem>>, vector<1x5x192xf32>
    %1 = vector.shape_cast %0 : vector<1x5x192xf32> to vector<5x192xf32>
    %2 = arith.truncf %1 : vector<5x192xf32> to vector<5x192xbf16>
    %c0_2 = arith.constant 0 : index
    %c0_3 = arith.constant 0 : index
    %3 = vector.load %arg2[%c0_2, %c0_3] : memref<192x32xbf16, #tpu.memory_space<vmem>>, vector<192x32xbf16>
    %cst = arith.constant dense<0.000000e+00> : vector<5x32xf32>
    %4 = tpu.matmul %2, %3, %cst {dimension_numbers = #tpu.dot_dimension_numbers<[1], [0], [0], [1], [0, 0, 1, 1], [], []>} : vector<5x192xbf16>, vector<192x32xbf16>, vector<5x32xf32> -> vector<5x32xf32>
    %c0_4 = arith.constant 0 : index
    %c0_5 = arith.constant 0 : index
    %5 = vector.load %arg3[%c0_4, %c0_5] : memref<5x32xf32, #tpu.memory_space<vmem>>, vector<5x32xf32>
    %6 = arith.addf %4, %5 : vector<5x32xf32>
    %c0_6 = arith.constant 0 : index
    %c0_7 = arith.constant 0 : index
    %7 = vector.load %arg4[%c0_6, %c0_7] : memref<1x32xf32, #tpu.memory_space<vmem>>, vector<1x32xf32>
    %c0_8 = arith.constant 0 : index
    %c0_9 = arith.constant 0 : index
    %8 = vector.load %arg5[%c0_8, %c0_9] : memref<1x32xf32, #tpu.memory_space<vmem>>, vector<1x32xf32>
    %cst_10 = arith.constant dense<0.000000e+00> : vector<5xf32>
    %9 = vector.multi_reduction <add>, %6, %cst_10 [1] : vector<5x32xf32> to vector<5xf32>
    %10 = vector.shape_cast %9 : vector<5xf32> to vector<5x1xf32>
    %cst_11 = arith.constant 3.200000e+01 : f32
    %11 = vector.broadcast %cst_11 : f32 to vector<5x1xf32>
    %12 = arith.divf %10, %11 : vector<5x1xf32>
    %13 = vector.broadcast %12 : vector<5x1xf32> to vector<5x32xf32>
    %14 = arith.subf %6, %13 : vector<5x32xf32>
    %15 = arith.mulf %14, %14 : vector<5x32xf32>
    %cst_12 = arith.constant dense<0.000000e+00> : vector<5xf32>
    %16 = vector.multi_reduction <add>, %15, %cst_12 [1] : vector<5x32xf32> to vector<5xf32>
    %17 = vector.shape_cast %16 : vector<5xf32> to vector<5x1xf32>
    %cst_13 = arith.constant 3.200000e+01 : f32
    %18 = vector.broadcast %cst_13 : f32 to vector<5x1xf32>
    %19 = arith.divf %17, %18 : vector<5x1xf32>
    %cst_14 = arith.constant 9.99999974E-6 : f32
    %20 = vector.broadcast %cst_14 : f32 to vector<5x1xf32>
    %21 = arith.addf %19, %20 : vector<5x1xf32>
    %22 = math.rsqrt %21 : vector<5x1xf32>
    %23 = vector.broadcast %22 : vector<5x1xf32> to vector<5x32xf32>
    %24 = arith.mulf %14, %23 : vector<5x32xf32>
    %25 = vector.broadcast %7 : vector<1x32xf32> to vector<5x32xf32>
    %26 = arith.mulf %24, %25 : vector<5x32xf32>
    %27 = vector.broadcast %8 : vector<1x32xf32> to vector<5x32xf32>
    %28 = arith.addf %26, %27 : vector<5x32xf32>
    %c0_15 = arith.constant 0 : index
    %c0_16 = arith.constant 0 : index
    %c0_17 = arith.constant 0 : index
    %29 = vector.load %arg6[%c0_15, %c0_16, %c0_17] : memref<1x5x32xf32, #tpu.memory_space<vmem>>, vector<1x5x32xf32>
    %30 = vector.shape_cast %29 : vector<1x5x32xf32> to vector<5x32xf32>
    %31 = vector.shape_cast %28 : vector<5x32xf32> to vector<1x5x32xf32>
    tpu.vector_store %arg6[%c0_15, %c0_16, %c0_17], %31 {strides = array<i32>} : memref<1x5x32xf32, #tpu.memory_space<vmem>>, vector<1x5x32xf32>,
    return
  }
  func.func @transform_0(%arg0: i32) -> (i32, i32, i32) {
    %c0_i32 = arith.constant 0 : i32
    %c0_i32_0 = arith.constant 0 : i32
    %c0_i32_1 = arith.constant 0 : i32
    return %arg0, %c0_i32, %c0_i32_0 : i32, i32, i32
  }
  func.func @transform_1(%arg0: i32) -> (i32, i32) {
    %c0_i32 = arith.constant 0 : i32
    %c0_i32_0 = arith.constant 0 : i32
    %c0_i32_1 = arith.constant 0 : i32
    return %c0_i32, %c0_i32_0 : i32, i32
  }
  func.func @transform_2(%arg0: i32) -> (i32, i32) {
    %c0_i32 = arith.constant 0 : i32
    %c0_i32_0 = arith.constant 0 : i32
    %c0_i32_1 = arith.constant 0 : i32
    return %c0_i32, %c0_i32_0 : i32, i32
  }
  func.func @transform_3(%arg0: i32) -> (i32, i32) {
    %c0_i32 = arith.constant 0 : i32
    %c0_i32_0 = arith.constant 0 : i32
    %c0_i32_1 = arith.constant 0 : i32
    return %c0_i32, %c0_i32_0 : i32, i32
  }
  func.func @transform_4(%arg0: i32) -> (i32, i32) {
    %c0_i32 = arith.constant 0 : i32
    %c0_i32_0 = arith.constant 0 : i32
    %c0_i32_1 = arith.constant 0 : i32
    return %c0_i32, %c0_i32_0 : i32, i32
  }
  func.func @transform_5(%arg0: i32) -> (i32, i32, i32) {
    %c0_i32 = arith.constant 0 : i32
    %c0_i32_0 = arith.constant 0 : i32
    %c0_i32_1 = arith.constant 0 : i32
    return %arg0, %c0_i32, %c0_i32_0 : i32, i32, i32
  }
}

module attributes {stable_mosaic.version = 11 : i64} {
  func.func @_encoder_kernel(%arg0: i32, %arg1: i32, %arg2: memref<1x5x32xf32, #tpu.memory_space<vmem>>, %arg3: memref<1x6x32xf32, #tpu.memory_space<vmem>>, %arg4: memref<1x32x96xbf16, #tpu.memory_space<vmem>>, %arg5: memref<1x1x96xf32, #tpu.memory_space<vmem>>, %arg6: memref<1x32x32xbf16, #tpu.memory_space<vmem>>, %arg7: memref<1x32x64xbf16, #tpu.memory_space<vmem>>, %arg8: memref<1x1x64xf32, #tpu.memory_space<vmem>>, %arg9: memref<1x64x32xbf16, #tpu.memory_space<vmem>>, %arg10: memref<1x5x32xf32, #tpu.memory_space<vmem>>, %arg11: memref<5x32xf32, #tpu.memory_space<vmem>>) attributes {dimension_semantics = [#tpu.dimension_semantics<parallel>, #tpu.dimension_semantics<arbitrary>], iteration_bounds = array<i64: 2, 2>, scalar_prefetch = 0 : i64, scratch_operands = 1 : i64, tpu.core_type = #tpu.core_type<tc>, window_params = [{transform_indices = @transform_0, window_bounds = array<i64: 1, 5, 32>}, {transform_indices = @transform_1, window_bounds = array<i64: 1, 6, 32>}, {transform_indices = @transform_2, window_bounds = array<i64: 1, 32, 96>}, {transform_indices = @transform_3, window_bounds = array<i64: 1, 1, 96>}, {transform_indices = @transform_4, window_bounds = array<i64: 1, 32, 32>}, {transform_indices = @transform_5, window_bounds = array<i64: 1, 32, 64>}, {transform_indices = @transform_6, window_bounds = array<i64: 1, 1, 64>}, {transform_indices = @transform_7, window_bounds = array<i64: 1, 64, 32>}, {transform_indices = @transform_8, window_bounds = array<i64: 1, 5, 32>}]} {
    %c0_i32 = arith.constant 0 : i32
    %0 = arith.cmpi eq, %arg1, %c0_i32 : i32
    %1 = arith.extui %0 : i1 to i32
    %c0_i32_0 = arith.constant 0 : i32
    %2 = arith.cmpi ne, %1, %c0_i32_0 : i32
    scf.if %2 {
      %c0_57 = arith.constant 0 : index
      %c0_58 = arith.constant 0 : index
      %c0_59 = arith.constant 0 : index
      %171 = vector.load %arg2[%c0_57, %c0_58, %c0_59] : memref<1x5x32xf32, #tpu.memory_space<vmem>>, vector<1x5x32xf32>
      %172 = vector.shape_cast %171 : vector<1x5x32xf32> to vector<5x32xf32>
      %c0_60 = arith.constant 0 : index
      %c0_61 = arith.constant 0 : index
      %173 = vector.load %arg11[%c0_60, %c0_61] : memref<5x32xf32, #tpu.memory_space<vmem>>, vector<5x32xf32>
      tpu.vector_store %arg11[%c0_60, %c0_61], %172 {strides = array<i32>} : memref<5x32xf32, #tpu.memory_space<vmem>>, vector<5x32xf32>,
    } else {
    }
    %c0 = arith.constant 0 : index
    %c0_1 = arith.constant 0 : index
    %3 = vector.load %arg11[%c0, %c0_1] : memref<5x32xf32, #tpu.memory_space<vmem>>, vector<5x32xf32>
    %c0_2 = arith.constant 0 : index
    %c0_3 = arith.constant 0 : index
    %c0_4 = arith.constant 0 : index
    %4 = vector.load %arg3[%c0_2, %c0_3, %c0_4] : memref<1x6x32xf32, #tpu.memory_space<vmem>>, vector<1x6x32xf32>
    %5 = vector.shape_cast %4 : vector<1x6x32xf32> to vector<6x32xf32>
    %6 = vector.extract_strided_slice %5 {offsets = [0, 0], sizes = [1, 32], strides = [1, 1]} : vector<6x32xf32> to vector<1x32xf32>
    %7 = vector.extract_strided_slice %5 {offsets = [1, 0], sizes = [1, 32], strides = [1, 1]} : vector<6x32xf32> to vector<1x32xf32>
    %8 = vector.extract_strided_slice %5 {offsets = [2, 0], sizes = [1, 32], strides = [1, 1]} : vector<6x32xf32> to vector<1x32xf32>
    %9 = vector.extract_strided_slice %5 {offsets = [3, 0], sizes = [1, 32], strides = [1, 1]} : vector<6x32xf32> to vector<1x32xf32>
    %10 = vector.extract_strided_slice %5 {offsets = [4, 0], sizes = [1, 32], strides = [1, 1]} : vector<6x32xf32> to vector<1x32xf32>
    %11 = vector.extract_strided_slice %5 {offsets = [5, 0], sizes = [1, 32], strides = [1, 1]} : vector<6x32xf32> to vector<1x32xf32>
    %cst = arith.constant dense<0.000000e+00> : vector<5xf32>
    %12 = vector.multi_reduction <add>, %3, %cst [1] : vector<5x32xf32> to vector<5xf32>
    %13 = vector.shape_cast %12 : vector<5xf32> to vector<5x1xf32>
    %cst_5 = arith.constant 3.200000e+01 : f32
    %14 = vector.broadcast %cst_5 : f32 to vector<5x1xf32>
    %15 = arith.divf %13, %14 : vector<5x1xf32>
    %16 = vector.broadcast %15 : vector<5x1xf32> to vector<5x32xf32>
    %17 = arith.subf %3, %16 : vector<5x32xf32>
    %18 = arith.mulf %17, %17 : vector<5x32xf32>
    %cst_6 = arith.constant dense<0.000000e+00> : vector<5xf32>
    %19 = vector.multi_reduction <add>, %18, %cst_6 [1] : vector<5x32xf32> to vector<5xf32>
    %20 = vector.shape_cast %19 : vector<5xf32> to vector<5x1xf32>
    %cst_7 = arith.constant 3.200000e+01 : f32
    %21 = vector.broadcast %cst_7 : f32 to vector<5x1xf32>
    %22 = arith.divf %20, %21 : vector<5x1xf32>
    %cst_8 = arith.constant 9.99999974E-6 : f32
    %23 = vector.broadcast %cst_8 : f32 to vector<5x1xf32>
    %24 = arith.addf %22, %23 : vector<5x1xf32>
    %25 = math.rsqrt %24 : vector<5x1xf32>
    %26 = vector.broadcast %25 : vector<5x1xf32> to vector<5x32xf32>
    %27 = arith.mulf %17, %26 : vector<5x32xf32>
    %28 = vector.broadcast %6 : vector<1x32xf32> to vector<5x32xf32>
    %29 = arith.mulf %27, %28 : vector<5x32xf32>
    %30 = vector.broadcast %7 : vector<1x32xf32> to vector<5x32xf32>
    %31 = arith.addf %29, %30 : vector<5x32xf32>
    %32 = arith.truncf %31 : vector<5x32xf32> to vector<5x32xbf16>
    %c0_9 = arith.constant 0 : index
    %c0_10 = arith.constant 0 : index
    %c0_11 = arith.constant 0 : index
    %33 = vector.load %arg4[%c0_9, %c0_10, %c0_11] : memref<1x32x96xbf16, #tpu.memory_space<vmem>>, vector<1x32x96xbf16>
    %34 = vector.shape_cast %33 : vector<1x32x96xbf16> to vector<32x96xbf16>
    %cst_12 = arith.constant dense<0.000000e+00> : vector<5x96xf32>
    %35 = tpu.matmul %32, %34, %cst_12 {dimension_numbers = #tpu.dot_dimension_numbers<[1], [0], [0], [1], [0, 0, 1, 1], [], []>} : vector<5x32xbf16>, vector<32x96xbf16>, vector<5x96xf32> -> vector<5x96xf32>
    %c0_13 = arith.constant 0 : index
    %c0_14 = arith.constant 0 : index
    %c0_15 = arith.constant 0 : index
    %36 = vector.load %arg5[%c0_13, %c0_14, %c0_15] : memref<1x1x96xf32, #tpu.memory_space<vmem>>, vector<1x1x96xf32>
    %37 = vector.shape_cast %36 : vector<1x1x96xf32> to vector<1x96xf32>
    %38 = vector.broadcast %37 : vector<1x96xf32> to vector<5x96xf32>
    %39 = arith.addf %35, %38 : vector<5x96xf32>
    %40 = vector.extract_strided_slice %39 {offsets = [0, 0], sizes = [5, 8], strides = [1, 1]} : vector<5x96xf32> to vector<5x8xf32>
    %41 = vector.extract_strided_slice %39 {offsets = [0, 32], sizes = [5, 8], strides = [1, 1]} : vector<5x96xf32> to vector<5x8xf32>
    %42 = vector.extract_strided_slice %39 {offsets = [0, 64], sizes = [5, 8], strides = [1, 1]} : vector<5x96xf32> to vector<5x8xf32>
    %43 = arith.truncf %40 : vector<5x8xf32> to vector<5x8xbf16>
    %44 = arith.truncf %41 : vector<5x8xf32> to vector<5x8xbf16>
    %cst_16 = arith.constant dense<0.000000e+00> : vector<5x5xf32>
    %45 = tpu.matmul %43, %44, %cst_16 {dimension_numbers = #tpu.dot_dimension_numbers<[1], [1], [0], [0], [0, 0, 1, 0], [], []>} : vector<5x8xbf16>, vector<5x8xbf16>, vector<5x5xf32> -> vector<5x5xf32>
    %cst_17 = arith.constant dense<0xFF800000> : vector<5xf32>
    %46 = vector.multi_reduction <maximumf>, %45, %cst_17 [1] : vector<5x5xf32> to vector<5xf32>
    %47 = vector.shape_cast %46 : vector<5xf32> to vector<5x1xf32>
    %48 = vector.broadcast %47 : vector<5x1xf32> to vector<5x5xf32>
    %49 = arith.subf %45, %48 : vector<5x5xf32>
    %50 = math.exp %49 : vector<5x5xf32>
    %cst_18 = arith.constant dense<0.000000e+00> : vector<5xf32>
    %51 = vector.multi_reduction <add>, %50, %cst_18 [1] : vector<5x5xf32> to vector<5xf32>
    %52 = vector.shape_cast %51 : vector<5xf32> to vector<5x1xf32>
    %53 = tpu.reciprocal %52 {approx = true} : vector<5x1xf32> -> vector<5x1xf32>
    %54 = vector.broadcast %53 : vector<5x1xf32> to vector<5x5xf32>
    %55 = arith.mulf %50, %54 : vector<5x5xf32>
    %56 = arith.truncf %55 : vector<5x5xf32> to vector<5x5xbf16>
    %57 = arith.truncf %42 : vector<5x8xf32> to vector<5x8xbf16>
    %cst_19 = arith.constant dense<0.000000e+00> : vector<5x8xf32>
    %58 = tpu.matmul %56, %57, %cst_19 {dimension_numbers = #tpu.dot_dimension_numbers<[1], [0], [0], [1], [0, 0, 1, 1], [], []>} : vector<5x5xbf16>, vector<5x8xbf16>, vector<5x8xf32> -> vector<5x8xf32>
    %59 = vector.extract_strided_slice %39 {offsets = [0, 8], sizes = [5, 8], strides = [1, 1]} : vector<5x96xf32> to vector<5x8xf32>
    %60 = vector.extract_strided_slice %39 {offsets = [0, 40], sizes = [5, 8], strides = [1, 1]} : vector<5x96xf32> to vector<5x8xf32>
    %61 = vector.extract_strided_slice %39 {offsets = [0, 72], sizes = [5, 8], strides = [1, 1]} : vector<5x96xf32> to vector<5x8xf32>
    %62 = arith.truncf %59 : vector<5x8xf32> to vector<5x8xbf16>
    %63 = arith.truncf %60 : vector<5x8xf32> to vector<5x8xbf16>
    %cst_20 = arith.constant dense<0.000000e+00> : vector<5x5xf32>
    %64 = tpu.matmul %62, %63, %cst_20 {dimension_numbers = #tpu.dot_dimension_numbers<[1], [1], [0], [0], [0, 0, 1, 0], [], []>} : vector<5x8xbf16>, vector<5x8xbf16>, vector<5x5xf32> -> vector<5x5xf32>
    %cst_21 = arith.constant dense<0xFF800000> : vector<5xf32>
    %65 = vector.multi_reduction <maximumf>, %64, %cst_21 [1] : vector<5x5xf32> to vector<5xf32>
    %66 = vector.shape_cast %65 : vector<5xf32> to vector<5x1xf32>
    %67 = vector.broadcast %66 : vector<5x1xf32> to vector<5x5xf32>
    %68 = arith.subf %64, %67 : vector<5x5xf32>
    %69 = math.exp %68 : vector<5x5xf32>
    %cst_22 = arith.constant dense<0.000000e+00> : vector<5xf32>
    %70 = vector.multi_reduction <add>, %69, %cst_22 [1] : vector<5x5xf32> to vector<5xf32>
    %71 = vector.shape_cast %70 : vector<5xf32> to vector<5x1xf32>
    %72 = tpu.reciprocal %71 {approx = true} : vector<5x1xf32> -> vector<5x1xf32>
    %73 = vector.broadcast %72 : vector<5x1xf32> to vector<5x5xf32>
    %74 = arith.mulf %69, %73 : vector<5x5xf32>
    %75 = arith.truncf %74 : vector<5x5xf32> to vector<5x5xbf16>
    %76 = arith.truncf %61 : vector<5x8xf32> to vector<5x8xbf16>
    %cst_23 = arith.constant dense<0.000000e+00> : vector<5x8xf32>
    %77 = tpu.matmul %75, %76, %cst_23 {dimension_numbers = #tpu.dot_dimension_numbers<[1], [0], [0], [1], [0, 0, 1, 1], [], []>} : vector<5x5xbf16>, vector<5x8xbf16>, vector<5x8xf32> -> vector<5x8xf32>
    %78 = vector.extract_strided_slice %39 {offsets = [0, 16], sizes = [5, 8], strides = [1, 1]} : vector<5x96xf32> to vector<5x8xf32>
    %79 = vector.extract_strided_slice %39 {offsets = [0, 48], sizes = [5, 8], strides = [1, 1]} : vector<5x96xf32> to vector<5x8xf32>
    %80 = vector.extract_strided_slice %39 {offsets = [0, 80], sizes = [5, 8], strides = [1, 1]} : vector<5x96xf32> to vector<5x8xf32>
    %81 = arith.truncf %78 : vector<5x8xf32> to vector<5x8xbf16>
    %82 = arith.truncf %79 : vector<5x8xf32> to vector<5x8xbf16>
    %cst_24 = arith.constant dense<0.000000e+00> : vector<5x5xf32>
    %83 = tpu.matmul %81, %82, %cst_24 {dimension_numbers = #tpu.dot_dimension_numbers<[1], [1], [0], [0], [0, 0, 1, 0], [], []>} : vector<5x8xbf16>, vector<5x8xbf16>, vector<5x5xf32> -> vector<5x5xf32>
    %cst_25 = arith.constant dense<0xFF800000> : vector<5xf32>
    %84 = vector.multi_reduction <maximumf>, %83, %cst_25 [1] : vector<5x5xf32> to vector<5xf32>
    %85 = vector.shape_cast %84 : vector<5xf32> to vector<5x1xf32>
    %86 = vector.broadcast %85 : vector<5x1xf32> to vector<5x5xf32>
    %87 = arith.subf %83, %86 : vector<5x5xf32>
    %88 = math.exp %87 : vector<5x5xf32>
    %cst_26 = arith.constant dense<0.000000e+00> : vector<5xf32>
    %89 = vector.multi_reduction <add>, %88, %cst_26 [1] : vector<5x5xf32> to vector<5xf32>
    %90 = vector.shape_cast %89 : vector<5xf32> to vector<5x1xf32>
    %91 = tpu.reciprocal %90 {approx = true} : vector<5x1xf32> -> vector<5x1xf32>
    %92 = vector.broadcast %91 : vector<5x1xf32> to vector<5x5xf32>
    %93 = arith.mulf %88, %92 : vector<5x5xf32>
    %94 = arith.truncf %93 : vector<5x5xf32> to vector<5x5xbf16>
    %95 = arith.truncf %80 : vector<5x8xf32> to vector<5x8xbf16>
    %cst_27 = arith.constant dense<0.000000e+00> : vector<5x8xf32>
    %96 = tpu.matmul %94, %95, %cst_27 {dimension_numbers = #tpu.dot_dimension_numbers<[1], [0], [0], [1], [0, 0, 1, 1], [], []>} : vector<5x5xbf16>, vector<5x8xbf16>, vector<5x8xf32> -> vector<5x8xf32>
    %97 = vector.extract_strided_slice %39 {offsets = [0, 24], sizes = [5, 8], strides = [1, 1]} : vector<5x96xf32> to vector<5x8xf32>
    %98 = vector.extract_strided_slice %39 {offsets = [0, 56], sizes = [5, 8], strides = [1, 1]} : vector<5x96xf32> to vector<5x8xf32>
    %99 = vector.extract_strided_slice %39 {offsets = [0, 88], sizes = [5, 8], strides = [1, 1]} : vector<5x96xf32> to vector<5x8xf32>
    %100 = arith.truncf %97 : vector<5x8xf32> to vector<5x8xbf16>
    %101 = arith.truncf %98 : vector<5x8xf32> to vector<5x8xbf16>
    %cst_28 = arith.constant dense<0.000000e+00> : vector<5x5xf32>
    %102 = tpu.matmul %100, %101, %cst_28 {dimension_numbers = #tpu.dot_dimension_numbers<[1], [1], [0], [0], [0, 0, 1, 0], [], []>} : vector<5x8xbf16>, vector<5x8xbf16>, vector<5x5xf32> -> vector<5x5xf32>
    %cst_29 = arith.constant dense<0xFF800000> : vector<5xf32>
    %103 = vector.multi_reduction <maximumf>, %102, %cst_29 [1] : vector<5x5xf32> to vector<5xf32>
    %104 = vector.shape_cast %103 : vector<5xf32> to vector<5x1xf32>
    %105 = vector.broadcast %104 : vector<5x1xf32> to vector<5x5xf32>
    %106 = arith.subf %102, %105 : vector<5x5xf32>
    %107 = math.exp %106 : vector<5x5xf32>
    %cst_30 = arith.constant dense<0.000000e+00> : vector<5xf32>
    %108 = vector.multi_reduction <add>, %107, %cst_30 [1] : vector<5x5xf32> to vector<5xf32>
    %109 = vector.shape_cast %108 : vector<5xf32> to vector<5x1xf32>
    %110 = tpu.reciprocal %109 {approx = true} : vector<5x1xf32> -> vector<5x1xf32>
    %111 = vector.broadcast %110 : vector<5x1xf32> to vector<5x5xf32>
    %112 = arith.mulf %107, %111 : vector<5x5xf32>
    %113 = arith.truncf %112 : vector<5x5xf32> to vector<5x5xbf16>
    %114 = arith.truncf %99 : vector<5x8xf32> to vector<5x8xbf16>
    %cst_31 = arith.constant dense<0.000000e+00> : vector<5x8xf32>
    %115 = tpu.matmul %113, %114, %cst_31 {dimension_numbers = #tpu.dot_dimension_numbers<[1], [0], [0], [1], [0, 0, 1, 1], [], []>} : vector<5x5xbf16>, vector<5x8xbf16>, vector<5x8xf32> -> vector<5x8xf32>
    %116 = tpu.concatenate %58, %77, %96, %115 in 1 : vector<5x8xf32>, vector<5x8xf32>, vector<5x8xf32>, vector<5x8xf32> -> vector<5x32xf32>
    %117 = arith.truncf %116 : vector<5x32xf32> to vector<5x32xbf16>
    %c0_32 = arith.constant 0 : index
    %c0_33 = arith.constant 0 : index
    %c0_34 = arith.constant 0 : index
    %118 = vector.load %arg6[%c0_32, %c0_33, %c0_34] : memref<1x32x32xbf16, #tpu.memory_space<vmem>>, vector<1x32x32xbf16>
    %119 = vector.shape_cast %118 : vector<1x32x32xbf16> to vector<32x32xbf16>
    %cst_35 = arith.constant dense<0.000000e+00> : vector<5x32xf32>
    %120 = tpu.matmul %117, %119, %cst_35 {dimension_numbers = #tpu.dot_dimension_numbers<[1], [0], [0], [1], [0, 0, 1, 1], [], []>} : vector<5x32xbf16>, vector<32x32xbf16>, vector<5x32xf32> -> vector<5x32xf32>
    %121 = vector.broadcast %10 : vector<1x32xf32> to vector<5x32xf32>
    %122 = arith.addf %120, %121 : vector<5x32xf32>
    %123 = arith.addf %3, %122 : vector<5x32xf32>
    %cst_36 = arith.constant dense<0.000000e+00> : vector<5xf32>
    %124 = vector.multi_reduction <add>, %123, %cst_36 [1] : vector<5x32xf32> to vector<5xf32>
    %125 = vector.shape_cast %124 : vector<5xf32> to vector<5x1xf32>
    %cst_37 = arith.constant 3.200000e+01 : f32
    %126 = vector.broadcast %cst_37 : f32 to vector<5x1xf32>
    %127 = arith.divf %125, %126 : vector<5x1xf32>
    %128 = vector.broadcast %127 : vector<5x1xf32> to vector<5x32xf32>
    %129 = arith.subf %123, %128 : vector<5x32xf32>
    %130 = arith.mulf %129, %129 : vector<5x32xf32>
    %cst_38 = arith.constant dense<0.000000e+00> : vector<5xf32>
    %131 = vector.multi_reduction <add>, %130, %cst_38 [1] : vector<5x32xf32> to vector<5xf32>
    %132 = vector.shape_cast %131 : vector<5xf32> to vector<5x1xf32>
    %cst_39 = arith.constant 3.200000e+01 : f32
    %133 = vector.broadcast %cst_39 : f32 to vector<5x1xf32>
    %134 = arith.divf %132, %133 : vector<5x1xf32>
    %cst_40 = arith.constant 9.99999974E-6 : f32
    %135 = vector.broadcast %cst_40 : f32 to vector<5x1xf32>
    %136 = arith.addf %134, %135 : vector<5x1xf32>
    %137 = math.rsqrt %136 : vector<5x1xf32>
    %138 = vector.broadcast %137 : vector<5x1xf32> to vector<5x32xf32>
    %139 = arith.mulf %129, %138 : vector<5x32xf32>
    %140 = vector.broadcast %8 : vector<1x32xf32> to vector<5x32xf32>
    %141 = arith.mulf %139, %140 : vector<5x32xf32>
    %142 = vector.broadcast %9 : vector<1x32xf32> to vector<5x32xf32>
    %143 = arith.addf %141, %142 : vector<5x32xf32>
    %144 = arith.truncf %143 : vector<5x32xf32> to vector<5x32xbf16>
    %c0_41 = arith.constant 0 : index
    %c0_42 = arith.constant 0 : index
    %c0_43 = arith.constant 0 : index
    %145 = vector.load %arg7[%c0_41, %c0_42, %c0_43] : memref<1x32x64xbf16, #tpu.memory_space<vmem>>, vector<1x32x64xbf16>
    %146 = vector.shape_cast %145 : vector<1x32x64xbf16> to vector<32x64xbf16>
    %cst_44 = arith.constant dense<0.000000e+00> : vector<5x64xf32>
    %147 = tpu.matmul %144, %146, %cst_44 {dimension_numbers = #tpu.dot_dimension_numbers<[1], [0], [0], [1], [0, 0, 1, 1], [], []>} : vector<5x32xbf16>, vector<32x64xbf16>, vector<5x64xf32> -> vector<5x64xf32>
    %c0_45 = arith.constant 0 : index
    %c0_46 = arith.constant 0 : index
    %c0_47 = arith.constant 0 : index
    %148 = vector.load %arg8[%c0_45, %c0_46, %c0_47] : memref<1x1x64xf32, #tpu.memory_space<vmem>>, vector<1x1x64xf32>
    %149 = vector.shape_cast %148 : vector<1x1x64xf32> to vector<1x64xf32>
    %150 = vector.broadcast %149 : vector<1x64xf32> to vector<5x64xf32>
    %151 = arith.addf %147, %150 : vector<5x64xf32>
    %cst_48 = arith.constant 1.702000e+00 : f32
    %152 = vector.broadcast %cst_48 : f32 to vector<5x64xf32>
    %153 = arith.mulf %152, %151 : vector<5x64xf32>
    %154 = arith.negf %153 : vector<5x64xf32>
    %155 = math.exp %154 : vector<5x64xf32>
    %cst_49 = arith.constant 1.000000e+00 : f32
    %156 = vector.broadcast %cst_49 : f32 to vector<5x64xf32>
    %157 = arith.addf %156, %155 : vector<5x64xf32>
    %158 = arith.divf %156, %157 : vector<5x64xf32>
    %159 = arith.mulf %151, %158 : vector<5x64xf32>
    %160 = arith.truncf %159 : vector<5x64xf32> to vector<5x64xbf16>
    %c0_50 = arith.constant 0 : index
    %c0_51 = arith.constant 0 : index
    %c0_52 = arith.constant 0 : index
    %161 = vector.load %arg9[%c0_50, %c0_51, %c0_52] : memref<1x64x32xbf16, #tpu.memory_space<vmem>>, vector<1x64x32xbf16>
    %162 = vector.shape_cast %161 : vector<1x64x32xbf16> to vector<64x32xbf16>
    %cst_53 = arith.constant dense<0.000000e+00> : vector<5x32xf32>
    %163 = tpu.matmul %160, %162, %cst_53 {dimension_numbers = #tpu.dot_dimension_numbers<[1], [0], [0], [1], [0, 0, 1, 1], [], []>} : vector<5x64xbf16>, vector<64x32xbf16>, vector<5x32xf32> -> vector<5x32xf32>
    %164 = vector.broadcast %11 : vector<1x32xf32> to vector<5x32xf32>
    %165 = arith.addf %163, %164 : vector<5x32xf32>
    %166 = arith.addf %123, %165 : vector<5x32xf32>
    %c0_54 = arith.constant 0 : index
    %c0_55 = arith.constant 0 : index
    %167 = vector.load %arg11[%c0_54, %c0_55] : memref<5x32xf32, #tpu.memory_space<vmem>>, vector<5x32xf32>
    tpu.vector_store %arg11[%c0_54, %c0_55], %166 {strides = array<i32>} : memref<5x32xf32, #tpu.memory_space<vmem>>, vector<5x32xf32>,
    %c1_i32 = arith.constant 1 : i32
    %168 = arith.cmpi eq, %arg1, %c1_i32 : i32
    %169 = arith.extui %168 : i1 to i32
    %c0_i32_56 = arith.constant 0 : i32
    %170 = arith.cmpi ne, %169, %c0_i32_56 : i32
    scf.if %170 {
      %c0_57 = arith.constant 0 : index
      %c0_58 = arith.constant 0 : index
      %171 = vector.load %arg11[%c0_57, %c0_58] : memref<5x32xf32, #tpu.memory_space<vmem>>, vector<5x32xf32>
      %c0_59 = arith.constant 0 : index
      %c0_60 = arith.constant 0 : index
      %c0_61 = arith.constant 0 : index
      %172 = vector.load %arg10[%c0_59, %c0_60, %c0_61] : memref<1x5x32xf32, #tpu.memory_space<vmem>>, vector<1x5x32xf32>
      %173 = vector.shape_cast %172 : vector<1x5x32xf32> to vector<5x32xf32>
      %174 = vector.shape_cast %171 : vector<5x32xf32> to vector<1x5x32xf32>
      tpu.vector_store %arg10[%c0_59, %c0_60, %c0_61], %174 {strides = array<i32>} : memref<1x5x32xf32, #tpu.memory_space<vmem>>, vector<1x5x32xf32>,
    } else {
    }
    return
  }
  func.func @transform_0(%arg0: i32, %arg1: i32) -> (i32, i32, i32) {
    %c0_i32 = arith.constant 0 : i32
    %c0_i32_0 = arith.constant 0 : i32
    %c0_i32_1 = arith.constant 0 : i32
    return %arg0, %c0_i32, %c0_i32_0 : i32, i32, i32
  }
  func.func @transform_1(%arg0: i32, %arg1: i32) -> (i32, i32, i32) {
    %c0_i32 = arith.constant 0 : i32
    %c0_i32_0 = arith.constant 0 : i32
    %c0_i32_1 = arith.constant 0 : i32
    return %arg1, %c0_i32, %c0_i32_0 : i32, i32, i32
  }
  func.func @transform_2(%arg0: i32, %arg1: i32) -> (i32, i32, i32) {
    %c0_i32 = arith.constant 0 : i32
    %c0_i32_0 = arith.constant 0 : i32
    %c0_i32_1 = arith.constant 0 : i32
    return %arg1, %c0_i32, %c0_i32_0 : i32, i32, i32
  }
  func.func @transform_3(%arg0: i32, %arg1: i32) -> (i32, i32, i32) {
    %c0_i32 = arith.constant 0 : i32
    %c0_i32_0 = arith.constant 0 : i32
    %c0_i32_1 = arith.constant 0 : i32
    return %arg1, %c0_i32, %c0_i32_0 : i32, i32, i32
  }
  func.func @transform_4(%arg0: i32, %arg1: i32) -> (i32, i32, i32) {
    %c0_i32 = arith.constant 0 : i32
    %c0_i32_0 = arith.constant 0 : i32
    %c0_i32_1 = arith.constant 0 : i32
    return %arg1, %c0_i32, %c0_i32_0 : i32, i32, i32
  }
  func.func @transform_5(%arg0: i32, %arg1: i32) -> (i32, i32, i32) {
    %c0_i32 = arith.constant 0 : i32
    %c0_i32_0 = arith.constant 0 : i32
    %c0_i32_1 = arith.constant 0 : i32
    return %arg1, %c0_i32, %c0_i32_0 : i32, i32, i32
  }
  func.func @transform_6(%arg0: i32, %arg1: i32) -> (i32, i32, i32) {
    %c0_i32 = arith.constant 0 : i32
    %c0_i32_0 = arith.constant 0 : i32
    %c0_i32_1 = arith.constant 0 : i32
    return %arg1, %c0_i32, %c0_i32_0 : i32, i32, i32
  }
  func.func @transform_7(%arg0: i32, %arg1: i32) -> (i32, i32, i32) {
    %c0_i32 = arith.constant 0 : i32
    %c0_i32_0 = arith.constant 0 : i32
    %c0_i32_1 = arith.constant 0 : i32
    return %arg1, %c0_i32, %c0_i32_0 : i32, i32, i32
  }
  func.func @transform_8(%arg0: i32, %arg1: i32) -> (i32, i32, i32) {
    %c0_i32 = arith.constant 0 : i32
    %c0_i32_0 = arith.constant 0 : i32
    %c0_i32_1 = arith.constant 0 : i32
    return %arg0, %c0_i32, %c0_i32_0 : i32, i32, i32
  }
}

</mosaic_0001>

<llo_original>
// kernel: clip_vision_tower_forward.2
$region0: #{clip_vision_tower_forward.2}
  #allocation0 [shape = 'u32[]', space=smem, size = 0x4, offset = 0x4, fixed_abs, tag = 'smem constant byte address 0x4 - core index']
  #allocation1 [shape = 'u32[144,128]{1,0:T(1,128)}', space=vmem, size = 0x12000, scoped, tag = 'internal scratch']
  %s0 = inlined_call_operand.vmem [shape: f32[2,5,192], index: 0, kind: input, shape index: {}]
  %s1 = inlined_call_operand.vmem [shape: bf16[192,32], index: 1, kind: input, shape index: {}]
  %s2 = inlined_call_operand.vmem [shape: f32[5,32], index: 2, kind: input, shape index: {}]
  %s3 = inlined_call_operand.vmem [shape: f32[1,32], index: 3, kind: input, shape index: {}]
  %s4 = inlined_call_operand.vmem [shape: f32[1,32], index: 4, kind: input, shape index: {}]
  %s5 = inlined_call_operand.vmem [shape: f32[2,5,32], index: 5, kind: output, shape index: {}]
  %s6 = sld [smem:[#allocation0]]
  $region53: #{clip_vision_tower_forward.2} parent=0
    _
  %s8 = ssub.s32 1, %s6
  %s9 = scalar_select 0, %s8, %s6
  loop: start=0, step=1, limit=4
  $region2: #{clip_vision_tower_forward.2} parent=0 // loop_pre_header
    _
  $region3: #{clip_vision_tower_forward.2} parent=0 // loop_header
    %s11 = sphi 0, %s15
    %p12 = scmp.ge.s32.totalorder %s11, 4
    %s21 = sphi 0, %s23
    %s24 = sphi 0, %s21
    %s25 = sphi 0, %s24
    %s41 = sphi 0, %s25
    %s45 = sphi 0, %s45
    %s47 = sphi 0, %s45
    %s48 = sphi 0, %s47
    %s62 = sphi 0, %s48
    %s66 = sphi 0, %s66
    %s68 = sphi 0, %s66
    %s69 = sphi 0, %s68
    %s83 = sphi 0, %s69
    %s87 = sphi 0, %s87
    %s89 = sphi 0, %s87
    %s90 = sphi 0, %s89
    %s104 = sphi 0, %s90
    %s108 = sphi 0, %s108
    %s110 = sphi 0, %s108
    %s111 = sphi 0, %s110
    %s125 = sphi 0, %s111
    %s131 = sphi 0, %s133
    %s134 = sphi 0, %s131
    %s135 = sphi 0, %s134
    %s151 = sphi 0, %s135
  $region4: #{clip_vision_tower_forward.2} parent=0 // loop_header_branch
    %14 = sbr.rel (%p12) target = $region8
  $region5: #{clip_vision_tower_forward.2} parent=0 // loop_body
    %s16 = ssub.s32 %s11, 1
    %s17 = ssub.s32 %s11, 2
    %s18 = sadd.s32 %s11, 1
    %s19 = ssub.s32 %s11, %s18
    %p20 = scmp.eq.s32.totalorder %s19, 0
    %s22 = sadd.s32 %s21, 1
    %s23 = scalar_select %p20, %s21, %s22
    %p26 = pneg %p20
    %p27 = scmp.eq.s32.totalorder %s11, 1
    %p28 = por %p26, %p27
    %p29 = scmp.ne.s32.totalorder %s21, %s24
    %p30 = scmp.eq.s32.totalorder %s11, 0
    %p31 = por %p29, %p30
    %p32 = scmp.ne.s32.totalorder %s21, %s24
    %p33 = scmp.eq.s32.totalorder %s16, 1
    %p34 = por %p32, %p33
    %p35 = scmp.ne.s32.totalorder %s24, %s25
    %p36 = scmp.eq.s32.totalorder %s16, 0
    %p37 = por %p35, %p36
    %p38 = scmp.ne.s32.totalorder %s24, %s25
    %p39 = scmp.eq.s32.totalorder %s17, 1
    %p40 = por %p38, %p39
    %p42 = scmp.ne.s32.totalorder %s25, %s41
    %p43 = scmp.eq.s32.totalorder %s17, 0
    %p44 = por %p42, %p43
    %s46 = sadd.s32 %s45, 1
    %p49 = scmp.eq.s32.totalorder %s11, 1
    %p50 = scmp.ne.s32.totalorder %s45, %s47
    %p51 = scmp.eq.s32.totalorder %s11, 0
    %p52 = por %p50, %p51
    %p53 = scmp.ne.s32.totalorder %s45, %s47
    %p54 = scmp.eq.s32.totalorder %s16, 1
    %p55 = por %p53, %p54
    %p56 = scmp.ne.s32.totalorder %s47, %s48
    %p57 = scmp.eq.s32.totalorder %s16, 0
    %p58 = por %p56, %p57
    %p59 = scmp.ne.s32.totalorder %s47, %s48
    %p60 = scmp.eq.s32.totalorder %s17, 1
    %p61 = por %p59, %p60
    %p63 = scmp.ne.s32.totalorder %s48, %s62
    %p64 = scmp.eq.s32.totalorder %s17, 0
    %p65 = por %p63, %p64
    %s67 = sadd.s32 %s66, 1
    %p70 = scmp.eq.s32.totalorder %s11, 1
    %p71 = scmp.ne.s32.totalorder %s66, %s68
    %p72 = scmp.eq.s32.totalorder %s11, 0
    %p73 = por %p71, %p72
    %p74 = scmp.ne.s32.totalorder %s66, %s68
    %p75 = scmp.eq.s32.totalorder %s16, 1
    %p76 = por %p74, %p75
    %p77 = scmp.ne.s32.totalorder %s68, %s69
    %p78 = scmp.eq.s32.totalorder %s16, 0
    %p79 = por %p77, %p78
    %p80 = scmp.ne.s32.totalorder %s68, %s69
    %p81 = scmp.eq.s32.totalorder %s17, 1
    %p82 = por %p80, %p81
    %p84 = scmp.ne.s32.totalorder %s69, %s83
    %p85 = scmp.eq.s32.totalorder %s17, 0
    %p86 = por %p84, %p85
    %s88 = sadd.s32 %s87, 1
    %p91 = scmp.eq.s32.totalorder %s11, 1
    %p92 = scmp.ne.s32.totalorder %s87, %s89
    %p93 = scmp.eq.s32.totalorder %s11, 0
    %p94 = por %p92, %p93
    %p95 = scmp.ne.s32.totalorder %s87, %s89
    %p96 = scmp.eq.s32.totalorder %s16, 1
    %p97 = por %p95, %p96
    %p98 = scmp.ne.s32.totalorder %s89, %s90
    %p99 = scmp.eq.s32.totalorder %s16, 0
    %p100 = por %p98, %p99
    %p101 = scmp.ne.s32.totalorder %s89, %s90
    %p102 = scmp.eq.s32.totalorder %s17, 1
    %p103 = por %p101, %p102
    %p105 = scmp.ne.s32.totalorder %s90, %s104
    %p106 = scmp.eq.s32.totalorder %s17, 0
    %p107 = por %p105, %p106
    %s109 = sadd.s32 %s108, 1
    %p112 = scmp.eq.s32.totalorder %s11, 1
    %p113 = scmp.ne.s32.totalorder %s108, %s110
    %p114 = scmp.eq.s32.totalorder %s11, 0
    %p115 = por %p113, %p114
    %p116 = scmp.ne.s32.totalorder %s108, %s110
    %p117 = scmp.eq.s32.totalorder %s16, 1
    %p118 = por %p116, %p117
    %p119 = scmp.ne.s32.totalorder %s110, %s111
    %p120 = scmp.eq.s32.totalorder %s16, 0
    %p121 = por %p119, %p120
    %p122 = scmp.ne.s32.totalorder %s110, %s111
    %p123 = scmp.eq.s32.totalorder %s17, 1
    %p124 = por %p122, %p123
    %p126 = scmp.ne.s32.totalorder %s111, %s125
    %p127 = scmp.eq.s32.totalorder %s17, 0
    %p128 = por %p126, %p127
    %s129 = ssub.s32 %s11, %s18
    %p130 = scmp.eq.s32.totalorder %s129, 0
    %s132 = sadd.s32 %s131, 1
    %s133 = scalar_select %p130, %s131, %s132
    %p136 = pneg %p130
    %p137 = scmp.eq.s32.totalorder %s11, 1
    %p138 = por %p136, %p137
    %p139 = scmp.ne.s32.totalorder %s131, %s134
    %p140 = scmp.eq.s32.totalorder %s11, 0
    %p141 = por %p139, %p140
    %p142 = scmp.ne.s32.totalorder %s131, %s134
    %p143 = scmp.eq.s32.totalorder %s16, 1
    %p144 = por %p142, %p143
    %p145 = scmp.ne.s32.totalorder %s134, %s135
    %p146 = scmp.eq.s32.totalorder %s16, 0
    %p147 = por %p145, %p146
    %p148 = scmp.ne.s32.totalorder %s134, %s135
    %p149 = scmp.eq.s32.totalorder %s17, 1
    %p150 = por %p148, %p149
    %p152 = scmp.ne.s32.totalorder %s135, %s151
    %p153 = scmp.eq.s32.totalorder %s17, 0
    %p154 = por %p152, %p153
    %p155 = scmp.le.s32.totalorder 1, %s11
    %p156 = scmp.lt.s32.totalorder %s11, 3
    %p157 = pnand %p155, %p156
    %p158 = pneg %p157
    // Predicated region
    $region9: #{clip_vision_tower_forward.2} parent=5 // pred_check
      _
    $region10: #{clip_vision_tower_forward.2} parent=5 // pred_check_branch
      %160 = sbr.rel (%p157) target = $region12
    $region11: #{clip_vision_tower_forward.2} parent=5 // pred_region
      %s161 = ssub.s32 %s11, 1
      // Predicated region
      $region13: #{clip_vision_tower_forward.2} parent=11 // pred_check
        %p162 = pneg %p58
      $region14: #{clip_vision_tower_forward.2} parent=11 // pred_check_branch
        %164 = sbr.rel (%p162) target = $region16
      $region15: #{clip_vision_tower_forward.2} parent=11 // pred_region
        _
      $region16: #{clip_vision_tower_forward.2} parent=11 // pred_fallthru
        _
      // Predicated region
      $region17: #{clip_vision_tower_forward.2} parent=11 // pred_check
        %p165 = pneg %p79
      $region18: #{clip_vision_tower_forward.2} parent=11 // pred_check_branch
        %167 = sbr.rel (%p165) target = $region20
      $region19: #{clip_vision_tower_forward.2} parent=11 // pred_region
        _
      $region20: #{clip_vision_tower_forward.2} parent=11 // pred_fallthru
        _
      // Predicated region
      $region21: #{clip_vision_tower_forward.2} parent=11 // pred_check
        %p168 = pneg %p100
      $region22: #{clip_vision_tower_forward.2} parent=11 // pred_check_branch
        %170 = sbr.rel (%p168) target = $region24
      $region23: #{clip_vision_tower_forward.2} parent=11 // pred_region
        _
      $region24: #{clip_vision_tower_forward.2} parent=11 // pred_fallthru
        _
      // Predicated region
      $region25: #{clip_vision_tower_forward.2} parent=11 // pred_check
        %p171 = pneg %p121
      $region26: #{clip_vision_tower_forward.2} parent=11 // pred_check_branch
        %173 = sbr.rel (%p171) target = $region28
      $region27: #{clip_vision_tower_forward.2} parent=11 // pred_region
        _
      $region28: #{clip_vision_tower_forward.2} parent=11 // pred_fallthru
        _
    $region12: #{clip_vision_tower_forward.2} parent=5 // pred_fallthru
      _
    %p174 = scmp.lt.s32.totalorder %s11, 2
    // Predicated region
    $region29: #{clip_vision_tower_forward.2} parent=5 // pred_check
      %p175 = pneg %p174
    $region30: #{clip_vision_tower_forward.2} parent=5 // pred_check_branch
      %177 = sbr.rel (%p175) target = $region32
    $region31: #{clip_vision_tower_forward.2} parent=5 // pred_region
      // Predicated region
      $region33: #{clip_vision_tower_forward.2} parent=31 // pred_check
        %p178 = pneg %p31
      $region34: #{clip_vision_tower_forward.2} parent=31 // pred_check_branch
        %180 = sbr.rel (%p178) target = $region36
      $region35: #{clip_vision_tower_forward.2} parent=31 // pred_region
        %p181 = scmp.lt.s32.totalorder %s11, 1
        %s182 = scalar_select %p181, %s11, 1
        %s183 = smul.addr %s182, 2
        %s184 = smul.addr %s183, 8
        %s185 = scalar_lea.vmem %s0, %s184
      $region36: #{clip_vision_tower_forward.2} parent=31 // pred_fallthru
        _
    $region32: #{clip_vision_tower_forward.2} parent=5 // pred_fallthru
      _
    %p186 = scmp.le.s32.totalorder 1, %s11
    %p187 = scmp.lt.s32.totalorder %s11, 3
    %p188 = pnand %p186, %p187
    %p189 = pneg %p188
    // Predicated region
    $region37: #{clip_vision_tower_forward.2} parent=5 // pred_check
      _
    $region38: #{clip_vision_tower_forward.2} parent=5 // pred_check_branch
      %191 = sbr.rel (%p188) target = $region40
    $region39: #{clip_vision_tower_forward.2} parent=5 // pred_region
      %s192 = ssub.s32 %s11, 1
      %p193 = scmp.lt.s32.totalorder %s16, 1
      %s194 = scalar_select %p193, %s16, 1
      %s195 = smul.addr %s194, 2
      %s196 = smul.addr %s195, 8
      %s197 = scalar_lea.vmem %s0, %s196
      %p198 = pneg %p37
      %p199 = pneg %p34
      %p200 = pneg %p58
      %p201 = pneg %p55
      %p202 = pneg %p79
      %p203 = pneg %p76
      %p204 = pneg %p100
      %p205 = pneg %p97
      %p206 = pneg %p121
      %p207 = pneg %p118
      %p208 = pneg %p147
      %p209 = pneg %p144
      %p210 = scmp.lt.s32.totalorder %s16, 1
      %s211 = scalar_select %p210, %s16, 1
      %s212 = smul.addr %s211, 8
      %s213 = scalar_lea.vmem %s5, %s212
      %p214 = scmp.lt.s32.totalorder %s16, 1
      %s215 = scalar_select %p214, %s16, 1
      %s216 = smul.addr %s215, 2
      %s217 = smul.addr %s216, 8
      %s218 = scalar_lea.vmem %s0, %s217
      %p219 = scmp.lt.s32.totalorder %s16, 1
      %s220 = scalar_select %p219, %s16, 1
      %s221 = smul.addr %s220, 8
      %s222 = scalar_lea.vmem %s5, %s221
      %v224 = vld [vmem:[%s218] sm:$0x1f]
      %v225 = vld [vmem:[%s218 + $0x8] sm:$0x1f]
      %v226 = vpack.c.bf16 %v224, %v224
      %v227 = vpack.c.bf16 %v225, %v225
      %v228 = vld [vmem:[%s1] sm:$0xf]
      %v229 = vld [vmem:[%s1 + $0x4] sm:$0xf]
      %v230 = vld [vmem:[%s1 + $0x8] sm:$0xf]
      %v231 = vld [vmem:[%s1 + $0xc] sm:$0xf]
      %v232 = vld [vmem:[%s1 + $0x10] sm:$0xf]
      %v233 = vld [vmem:[%s1 + $0x14] sm:$0xf]
      %v234 = vld [vmem:[%s1 + $0x18] sm:$0xf]
      %v235 = vld [vmem:[%s1 + $0x1c] sm:$0xf]
      %v236 = vld [vmem:[%s1 + $0x20] sm:$0xf]
      %v237 = vld [vmem:[%s1 + $0x24] sm:$0xf]
      %v238 = vld [vmem:[%s1 + $0x28] sm:$0xf]
      %v239 = vld [vmem:[%s1 + $0x2c] sm:$0xf]
      %v240 = vld [vmem:[%s1 + $0x30] sm:$0xf]
      %v241 = vld [vmem:[%s1 + $0x34] sm:$0xf]
      %v242 = vld [vmem:[%s1 + $0x38] sm:$0xf]
      %v243 = vld [vmem:[%s1 + $0x3c] sm:$0xf]
      %v244 = vld [vmem:[%s1 + $0x40] sm:$0xf]
      %v245 = vld [vmem:[%s1 + $0x44] sm:$0xf]
      %v246 = vld [vmem:[%s1 + $0x48] sm:$0xf]
      %v247 = vld [vmem:[%s1 + $0x4c] sm:$0xf]
      %v248 = vld [vmem:[%s1 + $0x50] sm:$0xf]
      %v249 = vld [vmem:[%s1 + $0x54] sm:$0xf]
      %v250 = vld [vmem:[%s1 + $0x58] sm:$0xf]
      %v251 = vld [vmem:[%s1 + $0x5c] sm:$0xf]
      %v252 = vld [vmem:[%s2] sm:$0x1f]
      %v277 = vunpack.c.l.b16 %v228
      %v278 = vunpack.c.l.b16 %v229
      %v279 = vunpack.c.l.b16 %v230
      %v280 = vunpack.c.l.b16 %v231
      %v281 = vunpack.c.l.b16 %v232
      %v282 = vunpack.c.l.b16 %v233
      %v283 = vunpack.c.l.b16 %v234
      %v284 = vunpack.c.l.b16 %v235
      %v285 = vunpack.c.l.b16 %v236
      %v286 = vunpack.c.l.b16 %v237
      %v287 = vunpack.c.l.b16 %v238
      %v288 = vunpack.c.l.b16 %v239
      %v289 = vunpack.c.l.b16 %v240
      %v290 = vunpack.c.l.b16 %v241
      %v291 = vunpack.c.l.b16 %v242
      %v292 = vunpack.c.l.b16 %v243
      %v293 = vunpack.c.l.b16 %v244
      %v294 = vunpack.c.l.b16 %v245
      %v295 = vunpack.c.l.b16 %v246
      %v296 = vunpack.c.l.b16 %v247
      %v297 = vunpack.c.l.b16 %v248
      %v298 = vunpack.c.l.b16 %v249
      %v299 = vunpack.c.l.b16 %v250
      %v300 = vunpack.c.l.b16 %v251
      %v301 = vpack.c.b16 %v278, %v277
      %v302 = vpack.c.b16 %v280, %v279
      %v303 = vpack.c.b16 %v282, %v281
      %v304 = vpack.c.b16 %v284, %v283
      %v305 = vpack.c.b16 %v286, %v285
      %v306 = vpack.c.b16 %v288, %v287
      %v307 = vpack.c.b16 %v290, %v289
      %v308 = vpack.c.b16 %v292, %v291
      %v309 = vpack.c.b16 %v294, %v293
      %v310 = vpack.c.b16 %v296, %v295
      %v311 = vpack.c.b16 %v298, %v297
      %v312 = vpack.c.b16 %v300, %v299
      %vm325 = vcmask 523264
      %v327 = vsel %vm325, %v227, 0
      %329 = vmatprep.subr.bf16.mxu0 0
      %330 = vmatpush1.bf16.msra.mxu0 %v301
      %331 = vmatprep.subr.bf16.mxu0 0
      %332 = vmatpush1.bf16.msra.mxu0 %v302
      %333 = vmatprep.subr.bf16.mxu0 0
      %334 = vmatpush1.bf16.msra.mxu0 %v303
      %335 = vmatprep.subr.bf16.mxu0 0
      %336 = vmatpush1.bf16.msra.mxu0 %v304
      %337 = vmatprep.subr.bf16.mxu0 0
      %338 = vmatpush1.bf16.msra.mxu0 %v305
      %339 = vmatprep.subr.bf16.mxu0 0
      %340 = vmatpush1.bf16.msra.mxu0 %v306
      %341 = vmatprep.subr.bf16.mxu0 0
      %342 = vmatpush1.bf16.msra.mxu0 %v307
      %343 = vmatprep.subr.bf16.mxu0 0
      %344 = vmatpush1.bf16.msra.mxu0 %v308
      %345 = vmatprep.subr.bf16.mxu0 0
      %346 = vmatpush1.bf16.msra.mxu0 %v309
      %347 = vmatprep.subr.bf16.mxu0 0
      %348 = vmatpush1.bf16.msra.mxu0 %v310
      %349 = vmatprep.subr.bf16.mxu0 0
      %350 = vmatpush1.bf16.msra.mxu0 %v311
      %351 = vmatprep.subr.bf16.mxu0 0
      %352 = vmatpush1.bf16.msra.mxu0 %v312
      %353 = vmatprep.subr.bf16.mxu0 0
      %354 = vmatpush1.bf16.msra.mxu0 0
      %355 = vmatprep.subr.bf16.mxu0 0
      %356 = vmatpush1.bf16.msra.mxu0 0
      %357 = vmatprep.subr.bf16.mxu0 0
      %358 = vmatpush1.bf16.msra.mxu0 0
      %359 = vmatprep.subr.bf16.mxu0 0
      %360 = vmatpush1.bf16.msra.mxu0 0
      %361 = vmatprep.mubr.bf16.mxu0 %v327
      %362 = vmatmul.mubr.bf16.gmra.mrb[0].mxu0 %v226
      %v363 = vpop.f32.mrb[0].mxu0
      %v364 = vadd.f32 %v252, %v363
      %v365 = vpop.f32.mrb[0].mxu0
      %v366 = vpop.f32.mrb[0].mxu0
      %v367 = vpop.f32.mrb[0].mxu0
      %368 = vdwg.mxu0
      %v369 = vld [vmem:[%s3] sm:$0x1]
      %v370 = vld [vmem:[%s4] sm:$0x1]
      %vm371 = vcmask 258048
      %v372 = vsel %vm371, %v364, 0.0
      %373 = vadd.xlane.f32.xlu0 %v372
      %v374 = vpop.xlane.xlu0 %373
      %v375 = vrcp.pop 32.0
      %v376 = vmul.f32 %v374, %v375
      %v377 = vsub.f32 %v364, %v376
      %v378 = vmul.f32 %v377, %v377
      %v379 = vsel %vm371, %v378, 0.0
      %380 = vadd.xlane.f32.xlu0 %v379
      %v381 = vpop.xlane.xlu0 %380
      %v382 = vmul.f32 %v381, %v375
      %v383 = vadd.f32 %v382, 1e-05
      %v384 = vrsqrt.pop %v383
      %v385 = vmul.f32 %v377, %v384
      %v387 = vlaneseq
      %v388 = vshrl.u32 %v387, 7
      %v389 = vsub.s32 0, %v388
      %v390 = vrot.slane %v369, %v389
      %v392 = vmul.f32 %v385, %v390
      %v394 = vlaneseq
      %v395 = vshrl.u32 %v394, 7
      %v396 = vsub.s32 0, %v395
      %v397 = vrot.slane %v370, %v396
      %v399 = vadd.f32 %v392, %v397
      %400 = vst.msk [vmem:[%s222] sm:$0x1f] %vm371, %v399
      %p401 = scmp.lt.s32.totalorder %s16, 1
      %s402 = scalar_select %p401, %s16, 1
      %s403 = smul.addr %s402, 8
      %s404 = scalar_lea.vmem %s5, %s403
      // Predicated region
      $region41: #{clip_vision_tower_forward.2} parent=39 // pred_check
        %p405 = pneg %p144
      $region42: #{clip_vision_tower_forward.2} parent=39 // pred_check_branch
        %407 = sbr.rel (%p405) target = $region44
      $region43: #{clip_vision_tower_forward.2} parent=39 // pred_region
        _
      $region44: #{clip_vision_tower_forward.2} parent=39 // pred_fallthru
        _
    $region40: #{clip_vision_tower_forward.2} parent=5 // pred_fallthru
      _
    %p408 = scmp.le.s32.totalorder 2, %s11
    // Predicated region
    $region45: #{clip_vision_tower_forward.2} parent=5 // pred_check
      %p409 = pneg %p408
    $region46: #{clip_vision_tower_forward.2} parent=5 // pred_check_branch
      %411 = sbr.rel (%p409) target = $region48
    $region47: #{clip_vision_tower_forward.2} parent=5 // pred_region
      %s412 = ssub.s32 %s11, 2
      // Predicated region
      $region49: #{clip_vision_tower_forward.2} parent=47 // pred_check
        %p413 = pneg %p150
      $region50: #{clip_vision_tower_forward.2} parent=47 // pred_check_branch
        %415 = sbr.rel (%p413) target = $region52
      $region51: #{clip_vision_tower_forward.2} parent=47 // pred_region
        %p416 = scmp.lt.s32.totalorder %s17, 1
        %s417 = scalar_select %p416, %s17, 1
        %s418 = smul.addr %s417, 8
        %s419 = scalar_lea.vmem %s5, %s418
      $region52: #{clip_vision_tower_forward.2} parent=47 // pred_fallthru
        _
    $region48: #{clip_vision_tower_forward.2} parent=5 // pred_fallthru
      _
  $region6: #{clip_vision_tower_forward.2} parent=0 // loop_footer
    %s15 = sadd.s32 1, %s11
  $region7: #{clip_vision_tower_forward.2} parent=0 // loop_footer_branch
    %10 = sbr.rel target = $region3
  $region8: #{clip_vision_tower_forward.2} parent=0 // loop_exit
    _

// kernel: clip_vision_tower_forward.3
$region0: #{clip_vision_tower_forward.3}
  #allocation0 [shape = 'u32[]', space=smem, size = 0x4, offset = 0x4, fixed_abs, tag = 'smem constant byte address 0x4 - core index']
  #allocation1 [shape = 'u32[144,128]{1,0:T(1,128)}', space=vmem, size = 0x12000, scoped, tag = 'internal scratch']
  #allocation2 [shape = 'f32[5,32]{1,0:T(8,128)}', space=vmem, size = 0x1000, scoped, tag = 'scratch operand']
  %s0 = inlined_call_operand.vmem [shape: f32[2,5,32], index: 0, kind: input, shape index: {}]
  %s1 = inlined_call_operand.vmem [shape: f32[2,6,32], index: 1, kind: input, shape index: {}]
  %s2 = inlined_call_operand.vmem [shape: bf16[2,32,96], index: 2, kind: input, shape index: {}]
  %s3 = inlined_call_operand.vmem [shape: f32[2,1,96], index: 3, kind: input, shape index: {}]
  %s4 = inlined_call_operand.vmem [shape: bf16[2,32,32], index: 4, kind: input, shape index: {}]
  %s5 = inlined_call_operand.vmem [shape: bf16[2,32,64], index: 5, kind: input, shape index: {}]
  %s6 = inlined_call_operand.vmem [shape: f32[2,1,64], index: 6, kind: input, shape index: {}]
  %s7 = inlined_call_operand.vmem [shape: bf16[2,64,32], index: 7, kind: input, shape index: {}]
  %s8 = inlined_call_operand.vmem [shape: f32[2,5,32], index: 8, kind: output, shape index: {}]
  %s9 = sld [smem:[#allocation0]]
  $region73: #{clip_vision_tower_forward.3} parent=0
    _
  %s11 = ssub.s32 1, %s9
  %s12 = scalar_select 0, %s11, %s9
  loop: start=0, step=1, limit=6
  $region2: #{clip_vision_tower_forward.3} parent=0 // loop_pre_header
    _
  $region3: #{clip_vision_tower_forward.3} parent=0 // loop_header
    %s14 = sphi 0, %s18
    %p15 = scmp.ge.s32.totalorder %s14, 6
    %s21 = sphi 0, %s33
    %s22 = sphi 0, %s29
    %s23 = sphi 0, %s21
    %s24 = sphi 0, %s22
    %s25 = sphi 0, %s23
    %s26 = sphi 0, %s24
    %s36 = sphi 0, %s38
    %s39 = sphi 0, %s36
    %s40 = sphi 0, %s39
    %s56 = sphi 0, %s40
    %s62 = sphi 0, %s64
    %s65 = sphi 0, %s62
    %s66 = sphi 0, %s65
    %s82 = sphi 0, %s66
    %s88 = sphi 0, %s90
    %s91 = sphi 0, %s88
    %s92 = sphi 0, %s91
    %s108 = sphi 0, %s92
    %s114 = sphi 0, %s116
    %s117 = sphi 0, %s114
    %s118 = sphi 0, %s117
    %s134 = sphi 0, %s118
    %s140 = sphi 0, %s142
    %s143 = sphi 0, %s140
    %s144 = sphi 0, %s143
    %s160 = sphi 0, %s144
    %s166 = sphi 0, %s168
    %s169 = sphi 0, %s166
    %s170 = sphi 0, %s169
    %s186 = sphi 0, %s170
    %s192 = sphi 0, %s194
    %s195 = sphi 0, %s192
    %s196 = sphi 0, %s195
    %s212 = sphi 0, %s196
    %s218 = sphi 0, %s220
    %s221 = sphi 0, %s218
    %s222 = sphi 0, %s221
    %s238 = sphi 0, %s222
    %s244 = sphi 0, %s246
    %s247 = sphi 0, %s244
    %s248 = sphi 0, %s247
    %s264 = sphi 0, %s248
  $region4: #{clip_vision_tower_forward.3} parent=0 // loop_header_branch
    %17 = sbr.rel (%p15) target = $region8
  $region5: #{clip_vision_tower_forward.3} parent=0 // loop_body
    %s19 = ssub.s32 %s14, 1
    %s20 = ssub.s32 %s14, 2
    %s27 = sadd.s32 1, %s22
    %p28 = scmp.ge.s32.totalorder %s27, 2
    %s29 = scalar_select %p28, 0, %s27
    %s30 = sadd.s32 1, %s21
    %s31 = scalar_select %p28, %s30, %s21
    %p32 = scmp.ge.s32.totalorder %s31, 2
    %s33 = scalar_select %p32, 0, %s31
    %s34 = ssub.s32 %s21, %s33
    %p35 = scmp.eq.s32.totalorder %s34, 0
    %s37 = sadd.s32 %s36, 1
    %s38 = scalar_select %p35, %s36, %s37
    %p41 = pneg %p35
    %p42 = scmp.eq.s32.totalorder %s14, 3
    %p43 = por %p41, %p42
    %p44 = scmp.ne.s32.totalorder %s36, %s39
    %p45 = scmp.eq.s32.totalorder %s14, 0
    %p46 = por %p44, %p45
    %p47 = scmp.ne.s32.totalorder %s36, %s39
    %p48 = scmp.eq.s32.totalorder %s19, 3
    %p49 = por %p47, %p48
    %p50 = scmp.ne.s32.totalorder %s39, %s40
    %p51 = scmp.eq.s32.totalorder %s19, 0
    %p52 = por %p50, %p51
    %p53 = scmp.ne.s32.totalorder %s39, %s40
    %p54 = scmp.eq.s32.totalorder %s20, 3
    %p55 = por %p53, %p54
    %p57 = scmp.ne.s32.totalorder %s40, %s56
    %p58 = scmp.eq.s32.totalorder %s20, 0
    %p59 = por %p57, %p58
    %s60 = ssub.s32 %s22, %s29
    %p61 = scmp.eq.s32.totalorder %s60, 0
    %s63 = sadd.s32 %s62, 1
    %s64 = scalar_select %p61, %s62, %s63
    %p67 = pneg %p61
    %p68 = scmp.eq.s32.totalorder %s14, 3
    %p69 = por %p67, %p68
    %p70 = scmp.ne.s32.totalorder %s62, %s65
    %p71 = scmp.eq.s32.totalorder %s14, 0
    %p72 = por %p70, %p71
    %p73 = scmp.ne.s32.totalorder %s62, %s65
    %p74 = scmp.eq.s32.totalorder %s19, 3
    %p75 = por %p73, %p74
    %p76 = scmp.ne.s32.totalorder %s65, %s66
    %p77 = scmp.eq.s32.totalorder %s19, 0
    %p78 = por %p76, %p77
    %p79 = scmp.ne.s32.totalorder %s65, %s66
    %p80 = scmp.eq.s32.totalorder %s20, 3
    %p81 = por %p79, %p80
    %p83 = scmp.ne.s32.totalorder %s66, %s82
    %p84 = scmp.eq.s32.totalorder %s20, 0
    %p85 = por %p83, %p84
    %s86 = ssub.s32 %s22, %s29
    %p87 = scmp.eq.s32.totalorder %s86, 0
    %s89 = sadd.s32 %s88, 1
    %s90 = scalar_select %p87, %s88, %s89
    %p93 = pneg %p87
    %p94 = scmp.eq.s32.totalorder %s14, 3
    %p95 = por %p93, %p94
    %p96 = scmp.ne.s32.totalorder %s88, %s91
    %p97 = scmp.eq.s32.totalorder %s14, 0
    %p98 = por %p96, %p97
    %p99 = scmp.ne.s32.totalorder %s88, %s91
    %p100 = scmp.eq.s32.totalorder %s19, 3
    %p101 = por %p99, %p100
    %p102 = scmp.ne.s32.totalorder %s91, %s92
    %p103 = scmp.eq.s32.totalorder %s19, 0
    %p104 = por %p102, %p103
    %p105 = scmp.ne.s32.totalorder %s91, %s92
    %p106 = scmp.eq.s32.totalorder %s20, 3
    %p107 = por %p105, %p106
    %p109 = scmp.ne.s32.totalorder %s92, %s108
    %p110 = scmp.eq.s32.totalorder %s20, 0
    %p111 = por %p109, %p110
    %s112 = ssub.s32 %s22, %s29
    %p113 = scmp.eq.s32.totalorder %s112, 0
    %s115 = sadd.s32 %s114, 1
    %s116 = scalar_select %p113, %s114, %s115
    %p119 = pneg %p113
    %p120 = scmp.eq.s32.totalorder %s14, 3
    %p121 = por %p119, %p120
    %p122 = scmp.ne.s32.totalorder %s114, %s117
    %p123 = scmp.eq.s32.totalorder %s14, 0
    %p124 = por %p122, %p123
    %p125 = scmp.ne.s32.totalorder %s114, %s117
    %p126 = scmp.eq.s32.totalorder %s19, 3
    %p127 = por %p125, %p126
    %p128 = scmp.ne.s32.totalorder %s117, %s118
    %p129 = scmp.eq.s32.totalorder %s19, 0
    %p130 = por %p128, %p129
    %p131 = scmp.ne.s32.totalorder %s117, %s118
    %p132 = scmp.eq.s32.totalorder %s20, 3
    %p133 = por %p131, %p132
    %p135 = scmp.ne.s32.totalorder %s118, %s134
    %p136 = scmp.eq.s32.totalorder %s20, 0
    %p137 = por %p135, %p136
    %s138 = ssub.s32 %s22, %s29
    %p139 = scmp.eq.s32.totalorder %s138, 0
    %s141 = sadd.s32 %s140, 1
    %s142 = scalar_select %p139, %s140, %s141
    %p145 = pneg %p139
    %p146 = scmp.eq.s32.totalorder %s14, 3
    %p147 = por %p145, %p146
    %p148 = scmp.ne.s32.totalorder %s140, %s143
    %p149 = scmp.eq.s32.totalorder %s14, 0
    %p150 = por %p148, %p149
    %p151 = scmp.ne.s32.totalorder %s140, %s143
    %p152 = scmp.eq.s32.totalorder %s19, 3
    %p153 = por %p151, %p152
    %p154 = scmp.ne.s32.totalorder %s143, %s144
    %p155 = scmp.eq.s32.totalorder %s19, 0
    %p156 = por %p154, %p155
    %p157 = scmp.ne.s32.totalorder %s143, %s144
    %p158 = scmp.eq.s32.totalorder %s20, 3
    %p159 = por %p157, %p158
    %p161 = scmp.ne.s32.totalorder %s144, %s160
    %p162 = scmp.eq.s32.totalorder %s20, 0
    %p163 = por %p161, %p162
    %s164 = ssub.s32 %s22, %s29
    %p165 = scmp.eq.s32.totalorder %s164, 0
    %s167 = sadd.s32 %s166, 1
    %s168 = scalar_select %p165, %s166, %s167
    %p171 = pneg %p165
    %p172 = scmp.eq.s32.totalorder %s14, 3
    %p173 = por %p171, %p172
    %p174 = scmp.ne.s32.totalorder %s166, %s169
    %p175 = scmp.eq.s32.totalorder %s14, 0
    %p176 = por %p174, %p175
    %p177 = scmp.ne.s32.totalorder %s166, %s169
    %p178 = scmp.eq.s32.totalorder %s19, 3
    %p179 = por %p177, %p178
    %p180 = scmp.ne.s32.totalorder %s169, %s170
    %p181 = scmp.eq.s32.totalorder %s19, 0
    %p182 = por %p180, %p181
    %p183 = scmp.ne.s32.totalorder %s169, %s170
    %p184 = scmp.eq.s32.totalorder %s20, 3
    %p185 = por %p183, %p184
    %p187 = scmp.ne.s32.totalorder %s170, %s186
    %p188 = scmp.eq.s32.totalorder %s20, 0
    %p189 = por %p187, %p188
    %s190 = ssub.s32 %s22, %s29
    %p191 = scmp.eq.s32.totalorder %s190, 0
    %s193 = sadd.s32 %s192, 1
    %s194 = scalar_select %p191, %s192, %s193
    %p197 = pneg %p191
    %p198 = scmp.eq.s32.totalorder %s14, 3
    %p199 = por %p197, %p198
    %p200 = scmp.ne.s32.totalorder %s192, %s195
    %p201 = scmp.eq.s32.totalorder %s14, 0
    %p202 = por %p200, %p201
    %p203 = scmp.ne.s32.totalorder %s192, %s195
    %p204 = scmp.eq.s32.totalorder %s19, 3
    %p205 = por %p203, %p204
    %p206 = scmp.ne.s32.totalorder %s195, %s196
    %p207 = scmp.eq.s32.totalorder %s19, 0
    %p208 = por %p206, %p207
    %p209 = scmp.ne.s32.totalorder %s195, %s196
    %p210 = scmp.eq.s32.totalorder %s20, 3
    %p211 = por %p209, %p210
    %p213 = scmp.ne.s32.totalorder %s196, %s212
    %p214 = scmp.eq.s32.totalorder %s20, 0
    %p215 = por %p213, %p214
    %s216 = ssub.s32 %s22, %s29
    %p217 = scmp.eq.s32.totalorder %s216, 0
    %s219 = sadd.s32 %s218, 1
    %s220 = scalar_select %p217, %s218, %s219
    %p223 = pneg %p217
    %p224 = scmp.eq.s32.totalorder %s14, 3
    %p225 = por %p223, %p224
    %p226 = scmp.ne.s32.totalorder %s218, %s221
    %p227 = scmp.eq.s32.totalorder %s14, 0
    %p228 = por %p226, %p227
    %p229 = scmp.ne.s32.totalorder %s218, %s221
    %p230 = scmp.eq.s32.totalorder %s19, 3
    %p231 = por %p229, %p230
    %p232 = scmp.ne.s32.totalorder %s221, %s222
    %p233 = scmp.eq.s32.totalorder %s19, 0
    %p234 = por %p232, %p233
    %p235 = scmp.ne.s32.totalorder %s221, %s222
    %p236 = scmp.eq.s32.totalorder %s20, 3
    %p237 = por %p235, %p236
    %p239 = scmp.ne.s32.totalorder %s222, %s238
    %p240 = scmp.eq.s32.totalorder %s20, 0
    %p241 = por %p239, %p240
    %s242 = ssub.s32 %s21, %s33
    %p243 = scmp.eq.s32.totalorder %s242, 0
    %s245 = sadd.s32 %s244, 1
    %s246 = scalar_select %p243, %s244, %s245
    %p249 = pneg %p243
    %p250 = scmp.eq.s32.totalorder %s14, 3
    %p251 = por %p249, %p250
    %p252 = scmp.ne.s32.totalorder %s244, %s247
    %p253 = scmp.eq.s32.totalorder %s14, 0
    %p254 = por %p252, %p253
    %p255 = scmp.ne.s32.totalorder %s244, %s247
    %p256 = scmp.eq.s32.totalorder %s19, 3
    %p257 = por %p255, %p256
    %p258 = scmp.ne.s32.totalorder %s247, %s248
    %p259 = scmp.eq.s32.totalorder %s19, 0
    %p260 = por %p258, %p259
    %p261 = scmp.ne.s32.totalorder %s247, %s248
    %p262 = scmp.eq.s32.totalorder %s20, 3
    %p263 = por %p261, %p262
    %p265 = scmp.ne.s32.totalorder %s248, %s264
    %p266 = scmp.eq.s32.totalorder %s20, 0
    %p267 = por %p265, %p266
    %p268 = scmp.le.s32.totalorder 1, %s14
    %p269 = scmp.lt.s32.totalorder %s14, 5
    %p270 = pnand %p268, %p269
    %p271 = pneg %p270
    // Predicated region
    $region9: #{clip_vision_tower_forward.3} parent=5 // pred_check
      _
    $region10: #{clip_vision_tower_forward.3} parent=5 // pred_check_branch
      %273 = sbr.rel (%p270) target = $region12
    $region11: #{clip_vision_tower_forward.3} parent=5 // pred_region
      %s274 = ssub.s32 %s14, 1
    $region12: #{clip_vision_tower_forward.3} parent=5 // pred_fallthru
      _
    %p275 = scmp.lt.s32.totalorder %s14, 4
    // Predicated region
    $region13: #{clip_vision_tower_forward.3} parent=5 // pred_check
      %p276 = pneg %p275
    $region14: #{clip_vision_tower_forward.3} parent=5 // pred_check_branch
      %278 = sbr.rel (%p276) target = $region16
    $region15: #{clip_vision_tower_forward.3} parent=5 // pred_region
      // Predicated region
      $region17: #{clip_vision_tower_forward.3} parent=15 // pred_check
        %p279 = pneg %p46
      $region18: #{clip_vision_tower_forward.3} parent=15 // pred_check_branch
        %281 = sbr.rel (%p279) target = $region20
      $region19: #{clip_vision_tower_forward.3} parent=15 // pred_region
        %p282 = scmp.lt.s32.totalorder %s21, 1
        %s283 = scalar_select %p282, %s21, 1
        %s284 = smul.addr %s283, 8
        %s285 = scalar_lea.vmem %s0, %s284
      $region20: #{clip_vision_tower_forward.3} parent=15 // pred_fallthru
        _
      // Predicated region
      $region21: #{clip_vision_tower_forward.3} parent=15 // pred_check
        %p286 = pneg %p72
      $region22: #{clip_vision_tower_forward.3} parent=15 // pred_check_branch
        %288 = sbr.rel (%p286) target = $region24
      $region23: #{clip_vision_tower_forward.3} parent=15 // pred_region
        %p289 = scmp.lt.s32.totalorder %s22, 1
        %s290 = scalar_select %p289, %s22, 1
        %s291 = smul.addr %s290, 8
        %s292 = scalar_lea.vmem %s1, %s291
      $region24: #{clip_vision_tower_forward.3} parent=15 // pred_fallthru
        _
      // Predicated region
      $region25: #{clip_vision_tower_forward.3} parent=15 // pred_check
        %p293 = pneg %p98
      $region26: #{clip_vision_tower_forward.3} parent=15 // pred_check_branch
        %295 = sbr.rel (%p293) target = $region28
      $region27: #{clip_vision_tower_forward.3} parent=15 // pred_region
        %p296 = scmp.lt.s32.totalorder %s22, 1
        %s297 = scalar_select %p296, %s22, 1
        %s298 = smul.addr %s297, 4
        %s299 = smul.addr %s298, 4
        %s300 = scalar_lea.vmem %s2, %s299
      $region28: #{clip_vision_tower_forward.3} parent=15 // pred_fallthru
        _
      // Predicated region
      $region29: #{clip_vision_tower_forward.3} parent=15 // pred_check
        %p301 = pneg %p124
      $region30: #{clip_vision_tower_forward.3} parent=15 // pred_check_branch
        %303 = sbr.rel (%p301) target = $region32
      $region31: #{clip_vision_tower_forward.3} parent=15 // pred_region
        %p304 = scmp.lt.s32.totalorder %s22, 1
        %s305 = scalar_select %p304, %s22, 1
        %s306 = scalar_lea.vmem %s3, %s305
      $region32: #{clip_vision_tower_forward.3} parent=15 // pred_fallthru
        _
      // Predicated region
      $region33: #{clip_vision_tower_forward.3} parent=15 // pred_check
        %p307 = pneg %p150
      $region34: #{clip_vision_tower_forward.3} parent=15 // pred_check_branch
        %309 = sbr.rel (%p307) target = $region36
      $region35: #{clip_vision_tower_forward.3} parent=15 // pred_region
        %p310 = scmp.lt.s32.totalorder %s22, 1
        %s311 = scalar_select %p310, %s22, 1
        %s312 = smul.addr %s311, 4
        %s313 = smul.addr %s312, 4
        %s314 = scalar_lea.vmem %s4, %s313
      $region36: #{clip_vision_tower_forward.3} parent=15 // pred_fallthru
        _
      // Predicated region
      $region37: #{clip_vision_tower_forward.3} parent=15 // pred_check
        %p315 = pneg %p176
      $region38: #{clip_vision_tower_forward.3} parent=15 // pred_check_branch
        %317 = sbr.rel (%p315) target = $region40
      $region39: #{clip_vision_tower_forward.3} parent=15 // pred_region
        %p318 = scmp.lt.s32.totalorder %s22, 1
        %s319 = scalar_select %p318, %s22, 1
        %s320 = smul.addr %s319, 4
        %s321 = smul.addr %s320, 4
        %s322 = scalar_lea.vmem %s5, %s321
      $region40: #{clip_vision_tower_forward.3} parent=15 // pred_fallthru
        _
      // Predicated region
      $region41: #{clip_vision_tower_forward.3} parent=15 // pred_check
        %p323 = pneg %p202
      $region42: #{clip_vision_tower_forward.3} parent=15 // pred_check_branch
        %325 = sbr.rel (%p323) target = $region44
      $region43: #{clip_vision_tower_forward.3} parent=15 // pred_region
        %p326 = scmp.lt.s32.totalorder %s22, 1
        %s327 = scalar_select %p326, %s22, 1
        %s328 = scalar_lea.vmem %s6, %s327
      $region44: #{clip_vision_tower_forward.3} parent=15 // pred_fallthru
        _
      // Predicated region
      $region45: #{clip_vision_tower_forward.3} parent=15 // pred_check
        %p329 = pneg %p228
      $region46: #{clip_vision_tower_forward.3} parent=15 // pred_check_branch
        %331 = sbr.rel (%p329) target = $region48
      $region47: #{clip_vision_tower_forward.3} parent=15 // pred_region
        %p332 = scmp.lt.s32.totalorder %s22, 1
        %s333 = scalar_select %p332, %s22, 1
        %s334 = smul.addr %s333, 8
        %s335 = smul.addr %s334, 4
        %s336 = scalar_lea.vmem %s7, %s335
      $region48: #{clip_vision_tower_forward.3} parent=15 // pred_fallthru
        _
    $region16: #{clip_vision_tower_forward.3} parent=5 // pred_fallthru
      _
    %p337 = scmp.le.s32.totalorder 1, %s14
    %p338 = scmp.lt.s32.totalorder %s14, 5
    %p339 = pnand %p337, %p338
    %p340 = pneg %p339
    // Predicated region
    $region49: #{clip_vision_tower_forward.3} parent=5 // pred_check
      _
    $region50: #{clip_vision_tower_forward.3} parent=5 // pred_check_branch
      %342 = sbr.rel (%p339) target = $region52
    $region51: #{clip_vision_tower_forward.3} parent=5 // pred_region
      %s343 = ssub.s32 %s14, 1
      %p344 = scmp.lt.s32.totalorder %s23, 1
      %s345 = scalar_select %p344, %s23, 1
      %s346 = smul.addr %s345, 8
      %s347 = scalar_lea.vmem %s0, %s346
      %p348 = pneg %p52
      %p349 = pneg %p49
      %p350 = scmp.lt.s32.totalorder %s24, 1
      %s351 = scalar_select %p350, %s24, 1
      %s352 = smul.addr %s351, 8
      %s353 = scalar_lea.vmem %s1, %s352
      %p354 = pneg %p78
      %p355 = pneg %p75
      %p356 = scmp.lt.s32.totalorder %s24, 1
      %s357 = scalar_select %p356, %s24, 1
      %s358 = smul.addr %s357, 4
      %s359 = smul.addr %s358, 4
      %s360 = scalar_lea.vmem %s2, %s359
      %p361 = pneg %p104
      %p362 = pneg %p101
      %p363 = scmp.lt.s32.totalorder %s24, 1
      %s364 = scalar_select %p363, %s24, 1
      %s365 = scalar_lea.vmem %s3, %s364
      %p366 = pneg %p130
      %p367 = pneg %p127
      %p368 = scmp.lt.s32.totalorder %s24, 1
      %s369 = scalar_select %p368, %s24, 1
      %s370 = smul.addr %s369, 4
      %s371 = smul.addr %s370, 4
      %s372 = scalar_lea.vmem %s4, %s371
      %p373 = pneg %p156
      %p374 = pneg %p153
      %p375 = scmp.lt.s32.totalorder %s24, 1
      %s376 = scalar_select %p375, %s24, 1
      %s377 = smul.addr %s376, 4
      %s378 = smul.addr %s377, 4
      %s379 = scalar_lea.vmem %s5, %s378
      %p380 = pneg %p182
      %p381 = pneg %p179
      %p382 = scmp.lt.s32.totalorder %s24, 1
      %s383 = scalar_select %p382, %s24, 1
      %s384 = scalar_lea.vmem %s6, %s383
      %p385 = pneg %p208
      %p386 = pneg %p205
      %p387 = scmp.lt.s32.totalorder %s24, 1
      %s388 = scalar_select %p387, %s24, 1
      %s389 = smul.addr %s388, 8
      %s390 = smul.addr %s389, 4
      %s391 = scalar_lea.vmem %s7, %s390
      %p392 = pneg %p234
      %p393 = pneg %p231
      %p394 = pneg %p260
      %p395 = pneg %p257
      %p396 = scmp.lt.s32.totalorder %s23, 1
      %s397 = scalar_select %p396, %s23, 1
      %s398 = smul.addr %s397, 8
      %s399 = scalar_lea.vmem %s8, %s398
      %p400 = scmp.lt.s32.totalorder %s23, 1
      %s401 = scalar_select %p400, %s23, 1
      %s402 = smul.addr %s401, 8
      %s403 = scalar_lea.vmem %s0, %s402
      %p404 = scmp.lt.s32.totalorder %s24, 1
      %s405 = scalar_select %p404, %s24, 1
      %s406 = smul.addr %s405, 8
      %s407 = scalar_lea.vmem %s1, %s406
      %p408 = scmp.lt.s32.totalorder %s24, 1
      %s409 = scalar_select %p408, %s24, 1
      %s410 = smul.addr %s409, 4
      %s411 = smul.addr %s410, 4
      %s412 = scalar_lea.vmem %s2, %s411
      %p413 = scmp.lt.s32.totalorder %s24, 1
      %s414 = scalar_select %p413, %s24, 1
      %s415 = scalar_lea.vmem %s3, %s414
      %p416 = scmp.lt.s32.totalorder %s24, 1
      %s417 = scalar_select %p416, %s24, 1
      %s418 = smul.addr %s417, 4
      %s419 = smul.addr %s418, 4
      %s420 = scalar_lea.vmem %s4, %s419
      %p421 = scmp.lt.s32.totalorder %s24, 1
      %s422 = scalar_select %p421, %s24, 1
      %s423 = smul.addr %s422, 4
      %s424 = smul.addr %s423, 4
      %s425 = scalar_lea.vmem %s5, %s424
      %p426 = scmp.lt.s32.totalorder %s24, 1
      %s427 = scalar_select %p426, %s24, 1
      %s428 = scalar_lea.vmem %s6, %s427
      %p429 = scmp.lt.s32.totalorder %s24, 1
      %s430 = scalar_select %p429, %s24, 1
      %s431 = smul.addr %s430, 8
      %s432 = smul.addr %s431, 4
      %s433 = scalar_lea.vmem %s7, %s432
      %p434 = scmp.lt.s32.totalorder %s23, 1
      %s435 = scalar_select %p434, %s23, 1
      %s436 = smul.addr %s435, 8
      %s437 = scalar_lea.vmem %s8, %s436
      %p439 = scmp.eq.s32.totalorder %s24, 0
      // Predicated region
      $region53: #{clip_vision_tower_forward.3} parent=51 // pred_check
        %p440 = pneg %p439
      $region54: #{clip_vision_tower_forward.3} parent=51 // pred_check_branch
        %442 = sbr.rel (%p440) target = $region56
      $region55: #{clip_vision_tower_forward.3} parent=51 // pred_region
        %v443 = vld [vmem:[%s403] sm:$0x1f]
        %vm444 = vcmask 258048
        %445 = vst.msk [vmem:[#allocation2] sm:$0x1f] %vm444, %v443
      $region56: #{clip_vision_tower_forward.3} parent=51 // pred_fallthru
        _
      %v446 = vld [vmem:[#allocation2] sm:$0x1f]
      %v447 = vld [vmem:[%s407] sm:$0x3f]
      %vm448 = vcmask 258048
      %v449 = vsel %vm448, %v446, 0.0
      %450 = vadd.xlane.f32.xlu0 %v449
      %v451 = vpop.xlane.xlu0 %450
      %v452 = vrcp.pop 32.0
      %v453 = vmul.f32 %v451, %v452
      %v454 = vsub.f32 %v446, %v453
      %v455 = vmul.f32 %v454, %v454
      %v456 = vsel %vm448, %v455, 0.0
      %457 = vadd.xlane.f32.xlu0 %v456
      %v458 = vpop.xlane.xlu0 %457
      %v459 = vmul.f32 %v458, %v452
      %v460 = vadd.f32 %v459, 1e-05
      %v461 = vrsqrt.pop %v460
      %v462 = vmul.f32 %v454, %v461
      %v463 = vlaneseq
      %v464 = vshrl.u32 %v463, 7
      %v465 = vsub.s32 0, %v464
      %v466 = vrot.slane %v447, %v465
      %v467 = vmul.f32 %v462, %v466
      %v468 = vlaneseq
      %v469 = vshrl.u32 %v468, 7
      %v470 = vsub.s32 1, %v469
      %v471 = vrot.slane %v447, %v470
      %v472 = vadd.f32 %v467, %v471
      %v473 = vpack.c.bf16 %v472, %v472
      %v474 = vld [vmem:[%s412] sm:$0xf]
      %v475 = vld [vmem:[%s412 + $0x4] sm:$0xf]
      %v476 = vld [vmem:[%s412 + $0x8] sm:$0xf]
      %v477 = vld [vmem:[%s412 + $0xc] sm:$0xf]
      %v478 = vld [vmem:[%s415] sm:$0x1]
      %v480 = vlaneseq
      %v481 = vshrl.u32 %v480, 7
      %v482 = vsub.s32 0, %v481
      %v483 = vrot.slane %v478, %v482
      %v489 = vunpack.c.l.b16 %v474
      %v490 = vunpack.c.l.b16 %v475
      %v491 = vunpack.c.l.b16 %v476
      %v492 = vunpack.c.l.b16 %v477
      %v493 = vpack.c.b16 %v490, %v489
      %v494 = vpack.c.b16 %v492, %v491
      %vm497 = vcmask 261120
      %v499 = vsel %vm497, %v473, 0
      %501 = vmatprep.subr.bf16.mxu0 0
      %502 = vmatpush1.bf16.msra.mxu0 %v493
      %503 = vmatprep.subr.bf16.mxu0 0
      %504 = vmatpush1.bf16.msra.mxu0 %v494
      %505 = vmatprep.subr.bf16.mxu0 0
      %506 = vmatpush1.bf16.msra.mxu0 0
      %507 = vmatprep.subr.bf16.mxu0 0
      %508 = vmatpush1.bf16.msra.mxu0 0
      %509 = vmatprep.subr.bf16.mxu0 0
      %510 = vmatpush1.bf16.msra.mxu0 0
      %511 = vmatprep.subr.bf16.mxu0 0
      %512 = vmatpush1.bf16.msra.mxu0 0
      %513 = vmatprep.subr.bf16.mxu0 0
      %514 = vmatpush1.bf16.msra.mxu0 0
      %515 = vmatprep.subr.bf16.mxu0 0
      %516 = vmatpush1.bf16.msra.mxu0 0
      %517 = vmatprep.subr.bf16.mxu0 0
      %518 = vmatpush1.bf16.msra.mxu0 0
      %519 = vmatprep.subr.bf16.mxu0 0
      %520 = vmatpush1.bf16.msra.mxu0 0
      %521 = vmatprep.subr.bf16.mxu0 0
      %522 = vmatpush1.bf16.msra.mxu0 0
      %523 = vmatprep.subr.bf16.mxu0 0
      %524 = vmatpush1.bf16.msra.mxu0 0
      %525 = vmatprep.subr.bf16.mxu0 0
      %526 = vmatpush1.bf16.msra.mxu0 0
      %527 = vmatprep.subr.bf16.mxu0 0
      %528 = vmatpush1.bf16.msra.mxu0 0
      %529 = vmatprep.subr.bf16.mxu0 0
      %530 = vmatpush1.bf16.msra.mxu0 0
      %531 = vmatprep.subr.bf16.mxu0 0
      %532 = vmatpush1.bf16.msra.mxu0 0
      %533 = vmatprep.mubr.bf16.mxu0 0
      %534 = vmatmul.mubr.bf16.gmra.mrb[0].mxu0 %v499
      %v535 = vpop.f32.mrb[0].mxu0
      %v536 = vadd.f32 %v483, %v535
      %v537 = vpop.f32.mrb[0].mxu0
      %v538 = vpop.f32.mrb[0].mxu0
      %v539 = vpop.f32.mrb[0].mxu0
      %540 = vdwg.mxu0
      %v541 = vpack.c.bf16 %v536, %v536
      %543 = vrot.lane.b32.xlu0 %v541, 96
      %v544 = vpop.permute.xlu0 %543
      %vm545 = vcmask 64512
      %v547 = vsel %vm545, %v541, 0
      %v550 = vsel %vm545, %v544, 0
      %552 = vmatprep.subr.bf16.mxu0 0
      %553 = vmatpush1.bf16.xpose.msra.mxu0 %v550
      %554 = vmatprep.subr.bf16.mxu0 0
      %555 = vmatpush1.bf16.xpose.msra.mxu0 0
      %556 = vmatprep.subr.bf16.mxu0 0
      %557 = vmatpush1.bf16.xpose.msra.mxu0 0
      %558 = vmatprep.subr.bf16.mxu0 0
      %559 = vmatpush1.bf16.xpose.msra.mxu0 0
      %560 = vmatprep.subr.bf16.mxu0 0
      %561 = vmatpush1.bf16.xpose.msra.mxu0 0
      %562 = vmatprep.subr.bf16.mxu0 0
      %563 = vmatpush1.bf16.xpose.msra.mxu0 0
      %564 = vmatprep.subr.bf16.mxu0 0
      %565 = vmatpush1.bf16.xpose.msra.mxu0 0
      %566 = vmatprep.subr.bf16.mxu0 0
      %567 = vmatpush1.bf16.xpose.msra.mxu0 0
      %568 = vmatprep.subr.bf16.mxu0 0
      %569 = vmatpush1.bf16.xpose.msra.mxu0 0
      %570 = vmatprep.subr.bf16.mxu0 0
      %571 = vmatpush1.bf16.xpose.msra.mxu0 0
      %572 = vmatprep.subr.bf16.mxu0 0
      %573 = vmatpush1.bf16.xpose.msra.mxu0 0
      %574 = vmatprep.subr.bf16.mxu0 0
      %575 = vmatpush1.bf16.xpose.msra.mxu0 0
      %576 = vmatprep.subr.bf16.mxu0 0
      %577 = vmatpush1.bf16.xpose.msra.mxu0 0
      %578 = vmatprep.subr.bf16.mxu0 0
      %579 = vmatpush1.bf16.xpose.msra.mxu0 0
      %580 = vmatprep.subr.bf16.mxu0 0
      %581 = vmatpush1.bf16.xpose.msra.mxu0 0
      %582 = vmatprep.subr.bf16.mxu0 0
      %583 = vmatpush1.bf16.xpose.msra.mxu0 0
      %584 = vmatprep.mubr.bf16.mxu0 0
      %585 = vmatmul.mubr.bf16.gmra.mrb[0].mxu0 %v547
      %v586 = vpop.f32.mrb[0].mxu0
      %v587 = vadd.f32 0.0, %v586
      %v588 = vpop.f32.mrb[0].mxu0
      %v589 = vpop.f32.mrb[0].mxu0
      %v590 = vpop.f32.mrb[0].mxu0
      %591 = vdwg.mxu0
      %vm592 = vcmask 36864
      %v593 = vsel %vm592, %v587, -inf
      %594 = vmax.xlane.f32.xlu0 %v593
      %v595 = vpop.xlane.xlu0 %594
      %v596 = vsub.f32 %v587, %v595
      %v597 = vmul.f32 %v596, 1.442695
      %v598 = vpow.pop %v597
      %v599 = vsel %vm592, %v598, 0.0
      %600 = vadd.xlane.f32.xlu0 %v599
      %v601 = vpop.xlane.xlu0 %600
      %v602 = vrcp.pop %v601
      %v603 = vmul.f32 %v598, %v602
      %v604 = vpack.c.bf16 %v603, %v603
      %605 = vrot.lane.b32.xlu0 %v541, 64
      %v606 = vpop.permute.xlu0 %605
      %vm607 = vcmask 39936
      %v609 = vsel %vm607, %v604, 0
      %vm611 = vcmask 1041408
      %vm612 = vcmask 1042432
      %v613 = vsel %vm611, 4294967295, 65535
      %v614 = vsel %vm612, %v613, 0
      %v616 = vand.u32 %v606, %v614
      %618 = vmatprep.subr.bf16.mxu0 0
      %619 = vmatpush1.bf16.msra.mxu0 %v616
      %620 = vmatprep.subr.bf16.mxu0 0
      %621 = vmatpush1.bf16.msra.mxu0 0
      %622 = vmatprep.subr.bf16.mxu0 0
      %623 = vmatpush1.bf16.msra.mxu0 0
      %624 = vmatprep.subr.bf16.mxu0 0
      %625 = vmatpush1.bf16.msra.mxu0 0
      %626 = vmatprep.subr.bf16.mxu0 0
      %627 = vmatpush1.bf16.msra.mxu0 0
      %628 = vmatprep.subr.bf16.mxu0 0
      %629 = vmatpush1.bf16.msra.mxu0 0
      %630 = vmatprep.subr.bf16.mxu0 0
      %631 = vmatpush1.bf16.msra.mxu0 0
      %632 = vmatprep.subr.bf16.mxu0 0
      %633 = vmatpush1.bf16.msra.mxu0 0
      %634 = vmatprep.subr.bf16.mxu0 0
      %635 = vmatpush1.bf16.msra.mxu0 0
      %636 = vmatprep.subr.bf16.mxu0 0
      %637 = vmatpush1.bf16.msra.mxu0 0
      %638 = vmatprep.subr.bf16.mxu0 0
      %639 = vmatpush1.bf16.msra.mxu0 0
      %640 = vmatprep.subr.bf16.mxu0 0
      %641 = vmatpush1.bf16.msra.mxu0 0
      %642 = vmatprep.subr.bf16.mxu0 0
      %643 = vmatpush1.bf16.msra.mxu0 0
      %644 = vmatprep.subr.bf16.mxu0 0
      %645 = vmatpush1.bf16.msra.mxu0 0
      %646 = vmatprep.subr.bf16.mxu0 0
      %647 = vmatpush1.bf16.msra.mxu0 0
      %648 = vmatprep.subr.bf16.mxu0 0
      %649 = vmatpush1.bf16.msra.mxu0 0
      %650 = vmatprep.mubr.bf16.mxu0 0
      %651 = vmatmul.mubr.bf16.gmra.mrb[0].mxu0 %v609
      %v652 = vpop.f32.mrb[0].mxu0
      %v653 = vadd.f32 0.0, %v652
      %v654 = vpop.f32.mrb[0].mxu0
      %v655 = vpop.f32.mrb[0].mxu0
      %v656 = vpop.f32.mrb[0].mxu0
      %657 = vdwg.mxu0
      %658 = vrot.lane.b32.xlu0 %v541, 120
      %v659 = vpop.permute.xlu0 %658
      %660 = vrot.lane.b32.xlu0 %v541, 88
      %v661 = vpop.permute.xlu0 %660
      %v663 = vsel %vm545, %v659, 0
      %v666 = vsel %vm545, %v661, 0
      %668 = vmatprep.subr.bf16.mxu0 0
      %669 = vmatpush1.bf16.xpose.msra.mxu0 %v666
      %670 = vmatprep.subr.bf16.mxu0 0
      %671 = vmatpush1.bf16.xpose.msra.mxu0 0
      %672 = vmatprep.subr.bf16.mxu0 0
      %673 = vmatpush1.bf16.xpose.msra.mxu0 0
      %674 = vmatprep.subr.bf16.mxu0 0
      %675 = vmatpush1.bf16.xpose.msra.mxu0 0
      %676 = vmatprep.subr.bf16.mxu0 0
      %677 = vmatpush1.bf16.xpose.msra.mxu0 0
      %678 = vmatprep.subr.bf16.mxu0 0
      %679 = vmatpush1.bf16.xpose.msra.mxu0 0
      %680 = vmatprep.subr.bf16.mxu0 0
      %681 = vmatpush1.bf16.xpose.msra.mxu0 0
      %682 = vmatprep.subr.bf16.mxu0 0
      %683 = vmatpush1.bf16.xpose.msra.mxu0 0
      %684 = vmatprep.subr.bf16.mxu0 0
      %685 = vmatpush1.bf16.xpose.msra.mxu0 0
      %686 = vmatprep.subr.bf16.mxu0 0
      %687 = vmatpush1.bf16.xpose.msra.mxu0 0
      %688 = vmatprep.subr.bf16.mxu0 0
      %689 = vmatpush1.bf16.xpose.msra.mxu0 0
      %690 = vmatprep.subr.bf16.mxu0 0
      %691 = vmatpush1.bf16.xpose.msra.mxu0 0
      %692 = vmatprep.subr.bf16.mxu0 0
      %693 = vmatpush1.bf16.xpose.msra.mxu0 0
      %694 = vmatprep.subr.bf16.mxu0 0
      %695 = vmatpush1.bf16.xpose.msra.mxu0 0
      %696 = vmatprep.subr.bf16.mxu0 0
      %697 = vmatpush1.bf16.xpose.msra.mxu0 0
      %698 = vmatprep.subr.bf16.mxu0 0
      %699 = vmatpush1.bf16.xpose.msra.mxu0 0
      %700 = vmatprep.mubr.bf16.mxu0 0
      %701 = vmatmul.mubr.bf16.gmra.mrb[0].mxu0 %v663
      %v702 = vpop.f32.mrb[0].mxu0
      %v703 = vadd.f32 0.0, %v702
      %v704 = vpop.f32.mrb[0].mxu0
      %v705 = vpop.f32.mrb[0].mxu0
      %v706 = vpop.f32.mrb[0].mxu0
      %707 = vdwg.mxu0
      %v708 = vsel %vm592, %v703, -inf
      %709 = vmax.xlane.f32.xlu0 %v708
      %v710 = vpop.xlane.xlu0 %709
      %v711 = vsub.f32 %v703, %v710
      %v712 = vmul.f32 %v711, 1.442695
      %v713 = vpow.pop %v712
      %v714 = vsel %vm592, %v713, 0.0
      %715 = vadd.xlane.f32.xlu0 %v714
      %v716 = vpop.xlane.xlu0 %715
      %v717 = vrcp.pop %v716
      %v718 = vmul.f32 %v713, %v717
      %v719 = vpack.c.bf16 %v718, %v718
      %720 = vrot.lane.b32.xlu0 %v541, 56
      %v721 = vpop.permute.xlu0 %720
      %v723 = vsel %vm607, %v719, 0
      %v726 = vand.u32 %v721, %v614
      %728 = vmatprep.subr.bf16.mxu0 0
      %729 = vmatpush1.bf16.msra.mxu0 %v726
      %730 = vmatprep.subr.bf16.mxu0 0
      %731 = vmatpush1.bf16.msra.mxu0 0
      %732 = vmatprep.subr.bf16.mxu0 0
      %733 = vmatpush1.bf16.msra.mxu0 0
      %734 = vmatprep.subr.bf16.mxu0 0
      %735 = vmatpush1.bf16.msra.mxu0 0
      %736 = vmatprep.subr.bf16.mxu0 0
      %737 = vmatpush1.bf16.msra.mxu0 0
      %738 = vmatprep.subr.bf16.mxu0 0
      %739 = vmatpush1.bf16.msra.mxu0 0
      %740 = vmatprep.subr.bf16.mxu0 0
      %741 = vmatpush1.bf16.msra.mxu0 0
      %742 = vmatprep.subr.bf16.mxu0 0
      %743 = vmatpush1.bf16.msra.mxu0 0
      %744 = vmatprep.subr.bf16.mxu0 0
      %745 = vmatpush1.bf16.msra.mxu0 0
      %746 = vmatprep.subr.bf16.mxu0 0
      %747 = vmatpush1.bf16.msra.mxu0 0
      %748 = vmatprep.subr.bf16.mxu0 0
      %749 = vmatpush1.bf16.msra.mxu0 0
      %750 = vmatprep.subr.bf16.mxu0 0
      %751 = vmatpush1.bf16.msra.mxu0 0
      %752 = vmatprep.subr.bf16.mxu0 0
      %753 = vmatpush1.bf16.msra.mxu0 0
      %754 = vmatprep.subr.bf16.mxu0 0
      %755 = vmatpush1.bf16.msra.mxu0 0
      %756 = vmatprep.subr.bf16.mxu0 0
      %757 = vmatpush1.bf16.msra.mxu0 0
      %758 = vmatprep.subr.bf16.mxu0 0
      %759 = vmatpush1.bf16.msra.mxu0 0
      %760 = vmatprep.mubr.bf16.mxu0 0
      %761 = vmatmul.mubr.bf16.gmra.mrb[0].mxu0 %v723
      %v762 = vpop.f32.mrb[0].mxu0
      %v763 = vadd.f32 0.0, %v762
      %v764 = vpop.f32.mrb[0].mxu0
      %v765 = vpop.f32.mrb[0].mxu0
      %v766 = vpop.f32.mrb[0].mxu0
      %767 = vdwg.mxu0
      %768 = vrot.lane.b32.xlu0 %v541, 112
      %v769 = vpop.permute.xlu0 %768
      %770 = vrot.lane.b32.xlu0 %v541, 80
      %v771 = vpop.permute.xlu0 %770
      %v773 = vsel %vm545, %v769, 0
      %v776 = vsel %vm545, %v771, 0
      %778 = vmatprep.subr.bf16.mxu0 0
      %779 = vmatpush1.bf16.xpose.msra.mxu0 %v776
      %780 = vmatprep.subr.bf16.mxu0 0
      %781 = vmatpush1.bf16.xpose.msra.mxu0 0
      %782 = vmatprep.subr.bf16.mxu0 0
      %783 = vmatpush1.bf16.xpose.msra.mxu0 0
      %784 = vmatprep.subr.bf16.mxu0 0
      %785 = vmatpush1.bf16.xpose.msra.mxu0 0
      %786 = vmatprep.subr.bf16.mxu0 0
      %787 = vmatpush1.bf16.xpose.msra.mxu0 0
      %788 = vmatprep.subr.bf16.mxu0 0
      %789 = vmatpush1.bf16.xpose.msra.mxu0 0
      %790 = vmatprep.subr.bf16.mxu0 0
      %791 = vmatpush1.bf16.xpose.msra.mxu0 0
      %792 = vmatprep.subr.bf16.mxu0 0
      %793 = vmatpush1.bf16.xpose.msra.mxu0 0
      %794 = vmatprep.subr.bf16.mxu0 0
      %795 = vmatpush1.bf16.xpose.msra.mxu0 0
      %796 = vmatprep.subr.bf16.mxu0 0
      %797 = vmatpush1.bf16.xpose.msra.mxu0 0
      %798 = vmatprep.subr.bf16.mxu0 0
      %799 = vmatpush1.bf16.xpose.msra.mxu0 0
      %800 = vmatprep.subr.bf16.mxu0 0
      %801 = vmatpush1.bf16.xpose.msra.mxu0 0
      %802 = vmatprep.subr.bf16.mxu0 0
      %803 = vmatpush1.bf16.xpose.msra.mxu0 0
      %804 = vmatprep.subr.bf16.mxu0 0
      %805 = vmatpush1.bf16.xpose.msra.mxu0 0
      %806 = vmatprep.subr.bf16.mxu0 0
      %807 = vmatpush1.bf16.xpose.msra.mxu0 0
      %808 = vmatprep.subr.bf16.mxu0 0
      %809 = vmatpush1.bf16.xpose.msra.mxu0 0
      %810 = vmatprep.mubr.bf16.mxu0 0
      %811 = vmatmul.mubr.bf16.gmra.mrb[0].mxu0 %v773
      %v812 = vpop.f32.mrb[0].mxu0
      %v813 = vadd.f32 0.0, %v812
      %v814 = vpop.f32.mrb[0].mxu0
      %v815 = vpop.f32.mrb[0].mxu0
      %v816 = vpop.f32.mrb[0].mxu0
      %817 = vdwg.mxu0
      %v818 = vsel %vm592, %v813, -inf
      %819 = vmax.xlane.f32.xlu0 %v818
      %v820 = vpop.xlane.xlu0 %819
      %v821 = vsub.f32 %v813, %v820
      %v822 = vmul.f32 %v821, 1.442695
      %v823 = vpow.pop %v822
      %v824 = vsel %vm592, %v823, 0.0
      %825 = vadd.xlane.f32.xlu0 %v824
      %v826 = vpop.xlane.xlu0 %825
      %v827 = vrcp.pop %v826
      %v828 = vmul.f32 %v823, %v827
      %v829 = vpack.c.bf16 %v828, %v828
      %830 = vrot.lane.b32.xlu0 %v541, 48
      %v831 = vpop.permute.xlu0 %830
      %v833 = vsel %vm607, %v829, 0
      %v836 = vand.u32 %v831, %v614
      %838 = vmatprep.subr.bf16.mxu0 0
      %839 = vmatpush1.bf16.msra.mxu0 %v836
      %840 = vmatprep.subr.bf16.mxu0 0
      %841 = vmatpush1.bf16.msra.mxu0 0
      %842 = vmatprep.subr.bf16.mxu0 0
      %843 = vmatpush1.bf16.msra.mxu0 0
      %844 = vmatprep.subr.bf16.mxu0 0
      %845 = vmatpush1.bf16.msra.mxu0 0
      %846 = vmatprep.subr.bf16.mxu0 0
      %847 = vmatpush1.bf16.msra.mxu0 0
      %848 = vmatprep.subr.bf16.mxu0 0
      %849 = vmatpush1.bf16.msra.mxu0 0
      %850 = vmatprep.subr.bf16.mxu0 0
      %851 = vmatpush1.bf16.msra.mxu0 0
      %852 = vmatprep.subr.bf16.mxu0 0
      %853 = vmatpush1.bf16.msra.mxu0 0
      %854 = vmatprep.subr.bf16.mxu0 0
      %855 = vmatpush1.bf16.msra.mxu0 0
      %856 = vmatprep.subr.bf16.mxu0 0
      %857 = vmatpush1.bf16.msra.mxu0 0
      %858 = vmatprep.subr.bf16.mxu0 0
      %859 = vmatpush1.bf16.msra.mxu0 0
      %860 = vmatprep.subr.bf16.mxu0 0
      %861 = vmatpush1.bf16.msra.mxu0 0
      %862 = vmatprep.subr.bf16.mxu0 0
      %863 = vmatpush1.bf16.msra.mxu0 0
      %864 = vmatprep.subr.bf16.mxu0 0
      %865 = vmatpush1.bf16.msra.mxu0 0
      %866 = vmatprep.subr.bf16.mxu0 0
      %867 = vmatpush1.bf16.msra.mxu0 0
      %868 = vmatprep.subr.bf16.mxu0 0
      %869 = vmatpush1.bf16.msra.mxu0 0
      %870 = vmatprep.mubr.bf16.mxu0 0
      %871 = vmatmul.mubr.bf16.gmra.mrb[0].mxu0 %v833
      %v872 = vpop.f32.mrb[0].mxu0
      %v873 = vadd.f32 0.0, %v872
      %v874 = vpop.f32.mrb[0].mxu0
      %v875 = vpop.f32.mrb[0].mxu0
      %v876 = vpop.f32.mrb[0].mxu0
      %877 = vdwg.mxu0
      %878 = vrot.lane.b32.xlu0 %v541, 104
      %v879 = vpop.permute.xlu0 %878
      %880 = vrot.lane.b32.xlu0 %v541, 72
      %v881 = vpop.permute.xlu0 %880
      %v883 = vsel %vm545, %v879, 0
      %v886 = vsel %vm545, %v881, 0
      %888 = vmatprep.subr.bf16.mxu0 0
      %889 = vmatpush1.bf16.xpose.msra.mxu0 %v886
      %890 = vmatprep.subr.bf16.mxu0 0
      %891 = vmatpush1.bf16.xpose.msra.mxu0 0
      %892 = vmatprep.subr.bf16.mxu0 0
      %893 = vmatpush1.bf16.xpose.msra.mxu0 0
      %894 = vmatprep.subr.bf16.mxu0 0
      %895 = vmatpush1.bf16.xpose.msra.mxu0 0
      %896 = vmatprep.subr.bf16.mxu0 0
      %897 = vmatpush1.bf16.xpose.msra.mxu0 0
      %898 = vmatprep.subr.bf16.mxu0 0
      %899 = vmatpush1.bf16.xpose.msra.mxu0 0
      %900 = vmatprep.subr.bf16.mxu0 0
      %901 = vmatpush1.bf16.xpose.msra.mxu0 0
      %902 = vmatprep.subr.bf16.mxu0 0
      %903 = vmatpush1.bf16.xpose.msra.mxu0 0
      %904 = vmatprep.subr.bf16.mxu0 0
      %905 = vmatpush1.bf16.xpose.msra.mxu0 0
      %906 = vmatprep.subr.bf16.mxu0 0
      %907 = vmatpush1.bf16.xpose.msra.mxu0 0
      %908 = vmatprep.subr.bf16.mxu0 0
      %909 = vmatpush1.bf16.xpose.msra.mxu0 0
      %910 = vmatprep.subr.bf16.mxu0 0
      %911 = vmatpush1.bf16.xpose.msra.mxu0 0
      %912 = vmatprep.subr.bf16.mxu0 0
      %913 = vmatpush1.bf16.xpose.msra.mxu0 0
      %914 = vmatprep.subr.bf16.mxu0 0
      %915 = vmatpush1.bf16.xpose.msra.mxu0 0
      %916 = vmatprep.subr.bf16.mxu0 0
      %917 = vmatpush1.bf16.xpose.msra.mxu0 0
      %918 = vmatprep.subr.bf16.mxu0 0
      %919 = vmatpush1.bf16.xpose.msra.mxu0 0
      %920 = vmatprep.mubr.bf16.mxu0 0
      %921 = vmatmul.mubr.bf16.gmra.mrb[0].mxu0 %v883
      %v922 = vpop.f32.mrb[0].mxu0
      %v923 = vadd.f32 0.0, %v922
      %v924 = vpop.f32.mrb[0].mxu0
      %v925 = vpop.f32.mrb[0].mxu0
      %v926 = vpop.f32.mrb[0].mxu0
      %927 = vdwg.mxu0
      %v928 = vsel %vm592, %v923, -inf
      %929 = vmax.xlane.f32.xlu0 %v928
      %v930 = vpop.xlane.xlu0 %929
      %v931 = vsub.f32 %v923, %v930
      %v932 = vmul.f32 %v931, 1.442695
      %v933 = vpow.pop %v932
      %v934 = vsel %vm592, %v933, 0.0
      %935 = vadd.xlane.f32.xlu0 %v934
      %v936 = vpop.xlane.xlu0 %935
      %v937 = vrcp.pop %v936
      %v938 = vmul.f32 %v933, %v937
      %v939 = vpack.c.bf16 %v938, %v938
      %940 = vrot.lane.b32.xlu0 %v541, 40
      %v941 = vpop.permute.xlu0 %940
      %v943 = vsel %vm607, %v939, 0
      %v946 = vand.u32 %v941, %v614
      %948 = vmatprep.subr.bf16.mxu0 0
      %949 = vmatpush1.bf16.msra.mxu0 %v946
      %950 = vmatprep.subr.bf16.mxu0 0
      %951 = vmatpush1.bf16.msra.mxu0 0
      %952 = vmatprep.subr.bf16.mxu0 0
      %953 = vmatpush1.bf16.msra.mxu0 0
      %954 = vmatprep.subr.bf16.mxu0 0
      %955 = vmatpush1.bf16.msra.mxu0 0
      %956 = vmatprep.subr.bf16.mxu0 0
      %957 = vmatpush1.bf16.msra.mxu0 0
      %958 = vmatprep.subr.bf16.mxu0 0
      %959 = vmatpush1.bf16.msra.mxu0 0
      %960 = vmatprep.subr.bf16.mxu0 0
      %961 = vmatpush1.bf16.msra.mxu0 0
      %962 = vmatprep.subr.bf16.mxu0 0
      %963 = vmatpush1.bf16.msra.mxu0 0
      %964 = vmatprep.subr.bf16.mxu0 0
      %965 = vmatpush1.bf16.msra.mxu0 0
      %966 = vmatprep.subr.bf16.mxu0 0
      %967 = vmatpush1.bf16.msra.mxu0 0
      %968 = vmatprep.subr.bf16.mxu0 0
      %969 = vmatpush1.bf16.msra.mxu0 0
      %970 = vmatprep.subr.bf16.mxu0 0
      %971 = vmatpush1.bf16.msra.mxu0 0
      %972 = vmatprep.subr.bf16.mxu0 0
      %973 = vmatpush1.bf16.msra.mxu0 0
      %974 = vmatprep.subr.bf16.mxu0 0
      %975 = vmatpush1.bf16.msra.mxu0 0
      %976 = vmatprep.subr.bf16.mxu0 0
      %977 = vmatpush1.bf16.msra.mxu0 0
      %978 = vmatprep.subr.bf16.mxu0 0
      %979 = vmatpush1.bf16.msra.mxu0 0
      %980 = vmatprep.mubr.bf16.mxu0 0
      %981 = vmatmul.mubr.bf16.gmra.mrb[0].mxu0 %v943
      %v982 = vpop.f32.mrb[0].mxu0
      %v983 = vadd.f32 0.0, %v982
      %v984 = vpop.f32.mrb[0].mxu0
      %v985 = vpop.f32.mrb[0].mxu0
      %v986 = vpop.f32.mrb[0].mxu0
      %987 = vdwg.mxu0
      %989 = vrot.lane.b32.xlu0 %v763, 8
      %v990 = vpop.permute.xlu0 %989
      %993 = vrot.lane.b32.xlu0 %v873, 16
      %v994 = vpop.permute.xlu0 %993
      %997 = vrot.lane.b32.xlu0 %v983, 24
      %v998 = vpop.permute.xlu0 %997
      %v1000 = vsel %vm545, %v653, %v990
      %vm1001 = vcmask 130048
      %v1002 = vsel %vm1001, %v1000, %v994
      %vm1003 = vcmask 195584
      %v1004 = vsel %vm1003, %v1002, %v998
      %v1005 = vpack.c.bf16 %v1004, %v1004
      %v1006 = vld [vmem:[%s420] sm:$0xf]
      %v1007 = vld [vmem:[%s420 + $0x4] sm:$0xf]
      %v1008 = vld [vmem:[%s420 + $0x8] sm:$0xf]
      %v1009 = vld [vmem:[%s420 + $0xc] sm:$0xf]
      %v1010 = vlaneseq
      %v1011 = vshrl.u32 %v1010, 7
      %v1012 = vsub.s32 4, %v1011
      %v1013 = vrot.slane %v447, %v1012
      %v1018 = vunpack.c.l.b16 %v1006
      %v1019 = vunpack.c.l.b16 %v1007
      %v1020 = vunpack.c.l.b16 %v1008
      %v1021 = vunpack.c.l.b16 %v1009
      %v1022 = vpack.c.b16 %v1019, %v1018
      %v1023 = vpack.c.b16 %v1021, %v1020
      %v1027 = vsel %vm497, %v1005, 0
      %1029 = vmatprep.subr.bf16.mxu0 0
      %1030 = vmatpush1.bf16.msra.mxu0 %v1022
      %1031 = vmatprep.subr.bf16.mxu0 0
      %1032 = vmatpush1.bf16.msra.mxu0 %v1023
      %1033 = vmatprep.subr.bf16.mxu0 0
      %1034 = vmatpush1.bf16.msra.mxu0 0
      %1035 = vmatprep.subr.bf16.mxu0 0
      %1036 = vmatpush1.bf16.msra.mxu0 0
      %1037 = vmatprep.subr.bf16.mxu0 0
      %1038 = vmatpush1.bf16.msra.mxu0 0
      %1039 = vmatprep.subr.bf16.mxu0 0
      %1040 = vmatpush1.bf16.msra.mxu0 0
      %1041 = vmatprep.subr.bf16.mxu0 0
      %1042 = vmatpush1.bf16.msra.mxu0 0
      %1043 = vmatprep.subr.bf16.mxu0 0
      %1044 = vmatpush1.bf16.msra.mxu0 0
      %1045 = vmatprep.subr.bf16.mxu0 0
      %1046 = vmatpush1.bf16.msra.mxu0 0
      %1047 = vmatprep.subr.bf16.mxu0 0
      %1048 = vmatpush1.bf16.msra.mxu0 0
      %1049 = vmatprep.subr.bf16.mxu0 0
      %1050 = vmatpush1.bf16.msra.mxu0 0
      %1051 = vmatprep.subr.bf16.mxu0 0
      %1052 = vmatpush1.bf16.msra.mxu0 0
      %1053 = vmatprep.subr.bf16.mxu0 0
      %1054 = vmatpush1.bf16.msra.mxu0 0
      %1055 = vmatprep.subr.bf16.mxu0 0
      %1056 = vmatpush1.bf16.msra.mxu0 0
      %1057 = vmatprep.subr.bf16.mxu0 0
      %1058 = vmatpush1.bf16.msra.mxu0 0
      %1059 = vmatprep.subr.bf16.mxu0 0
      %1060 = vmatpush1.bf16.msra.mxu0 0
      %1061 = vmatprep.mubr.bf16.mxu0 0
      %1062 = vmatmul.mubr.bf16.gmra.mrb[0].mxu0 %v1027
      %v1063 = vpop.f32.mrb[0].mxu0
      %v1064 = vadd.f32 %v1013, %v1063
      %v1065 = vpop.f32.mrb[0].mxu0
      %v1066 = vpop.f32.mrb[0].mxu0
      %v1067 = vpop.f32.mrb[0].mxu0
      %1068 = vdwg.mxu0
      %v1069 = vadd.f32 %v446, %v1064
      %v1070 = vsel %vm448, %v1069, 0.0
      %1071 = vadd.xlane.f32.xlu0 %v1070
      %v1072 = vpop.xlane.xlu0 %1071
      %v1073 = vmul.f32 %v1072, %v452
      %v1074 = vsub.f32 %v1069, %v1073
      %v1075 = vmul.f32 %v1074, %v1074
      %v1076 = vsel %vm448, %v1075, 0.0
      %1077 = vadd.xlane.f32.xlu0 %v1076
      %v1078 = vpop.xlane.xlu0 %1077
      %v1079 = vmul.f32 %v1078, %v452
      %v1080 = vadd.f32 %v1079, 1e-05
      %v1081 = vrsqrt.pop %v1080
      %v1082 = vmul.f32 %v1074, %v1081
      %v1083 = vlaneseq
      %v1084 = vshrl.u32 %v1083, 7
      %v1085 = vsub.s32 2, %v1084
      %v1086 = vrot.slane %v447, %v1085
      %v1087 = vmul.f32 %v1082, %v1086
      %v1088 = vlaneseq
      %v1089 = vshrl.u32 %v1088, 7
      %v1090 = vsub.s32 3, %v1089
      %v1091 = vrot.slane %v447, %v1090
      %v1092 = vadd.f32 %v1087, %v1091
      %v1093 = vpack.c.bf16 %v1092, %v1092
      %v1094 = vld [vmem:[%s425] sm:$0xf]
      %v1095 = vld [vmem:[%s425 + $0x4] sm:$0xf]
      %v1096 = vld [vmem:[%s425 + $0x8] sm:$0xf]
      %v1097 = vld [vmem:[%s425 + $0xc] sm:$0xf]
      %v1098 = vld [vmem:[%s428] sm:$0x1]
      %v1100 = vlaneseq
      %v1101 = vshrl.u32 %v1100, 7
      %v1102 = vsub.s32 0, %v1101
      %v1103 = vrot.slane %v1098, %v1102
      %v1109 = vunpack.c.l.b16 %v1094
      %v1110 = vunpack.c.l.b16 %v1095
      %v1111 = vunpack.c.l.b16 %v1096
      %v1112 = vunpack.c.l.b16 %v1097
      %v1113 = vpack.c.b16 %v1110, %v1109
      %v1114 = vpack.c.b16 %v1112, %v1111
      %v1118 = vsel %vm497, %v1093, 0
      %1120 = vmatprep.subr.bf16.mxu0 0
      %1121 = vmatpush1.bf16.msra.mxu0 %v1113
      %1122 = vmatprep.subr.bf16.mxu0 0
      %1123 = vmatpush1.bf16.msra.mxu0 %v1114
      %1124 = vmatprep.subr.bf16.mxu0 0
      %1125 = vmatpush1.bf16.msra.mxu0 0
      %1126 = vmatprep.subr.bf16.mxu0 0
      %1127 = vmatpush1.bf16.msra.mxu0 0
      %1128 = vmatprep.subr.bf16.mxu0 0
      %1129 = vmatpush1.bf16.msra.mxu0 0
      %1130 = vmatprep.subr.bf16.mxu0 0
      %1131 = vmatpush1.bf16.msra.mxu0 0
      %1132 = vmatprep.subr.bf16.mxu0 0
      %1133 = vmatpush1.bf16.msra.mxu0 0
      %1134 = vmatprep.subr.bf16.mxu0 0
      %1135 = vmatpush1.bf16.msra.mxu0 0
      %1136 = vmatprep.subr.bf16.mxu0 0
      %1137 = vmatpush1.bf16.msra.mxu0 0
      %1138 = vmatprep.subr.bf16.mxu0 0
      %1139 = vmatpush1.bf16.msra.mxu0 0
      %1140 = vmatprep.subr.bf16.mxu0 0
      %1141 = vmatpush1.bf16.msra.mxu0 0
      %1142 = vmatprep.subr.bf16.mxu0 0
      %1143 = vmatpush1.bf16.msra.mxu0 0
      %1144 = vmatprep.subr.bf16.mxu0 0
      %1145 = vmatpush1.bf16.msra.mxu0 0
      %1146 = vmatprep.subr.bf16.mxu0 0
      %1147 = vmatpush1.bf16.msra.mxu0 0
      %1148 = vmatprep.subr.bf16.mxu0 0
      %1149 = vmatpush1.bf16.msra.mxu0 0
      %1150 = vmatprep.subr.bf16.mxu0 0
      %1151 = vmatpush1.bf16.msra.mxu0 0
      %1152 = vmatprep.mubr.bf16.mxu0 0
      %1153 = vmatmul.mubr.bf16.gmra.mrb[0].mxu0 %v1118
      %v1154 = vpop.f32.mrb[0].mxu0
      %v1155 = vadd.f32 %v1103, %v1154
      %v1156 = vpop.f32.mrb[0].mxu0
      %v1157 = vpop.f32.mrb[0].mxu0
      %v1158 = vpop.f32.mrb[0].mxu0
      %1159 = vdwg.mxu0
      %v1160 = vmul.f32 %v1155, 1.702
      %v1161 = vxor.u32 %v1160, 2147483648
      %v1162 = vmul.f32 %v1161, 1.442695
      %v1163 = vpow.pop %v1162
      %v1164 = vadd.f32 %v1163, 1.0
      %v1165 = vrcp.pop %v1164
      %v1166 = vmul.f32 1.0, %v1165
      %v1167 = vmul.f32 %v1155, %v1166
      %v1168 = vpack.c.bf16 %v1167, %v1167
      %v1169 = vld [vmem:[%s433] sm:$0xf]
      %v1170 = vld [vmem:[%s433 + $0x4] sm:$0xf]
      %v1171 = vld [vmem:[%s433 + $0x8] sm:$0xf]
      %v1172 = vld [vmem:[%s433 + $0xc] sm:$0xf]
      %v1173 = vld [vmem:[%s433 + $0x10] sm:$0xf]
      %v1174 = vld [vmem:[%s433 + $0x14] sm:$0xf]
      %v1175 = vld [vmem:[%s433 + $0x18] sm:$0xf]
      %v1176 = vld [vmem:[%s433 + $0x1c] sm:$0xf]
      %v1177 = vlaneseq
      %v1178 = vshrl.u32 %v1177, 7
      %v1179 = vsub.s32 5, %v1178
      %v1180 = vrot.slane %v447, %v1179
      %v1189 = vunpack.c.l.b16 %v1169
      %v1190 = vunpack.c.l.b16 %v1170
      %v1191 = vunpack.c.l.b16 %v1171
      %v1192 = vunpack.c.l.b16 %v1172
      %v1193 = vunpack.c.l.b16 %v1173
      %v1194 = vunpack.c.l.b16 %v1174
      %v1195 = vunpack.c.l.b16 %v1175
      %v1196 = vunpack.c.l.b16 %v1176
      %v1197 = vpack.c.b16 %v1190, %v1189
      %v1198 = vpack.c.b16 %v1192, %v1191
      %v1199 = vpack.c.b16 %v1194, %v1193
      %v1200 = vpack.c.b16 %v1196, %v1195
      %vm1205 = vcmask 523264
      %v1207 = vsel %vm1205, %v1168, 0
      %1209 = vmatprep.subr.bf16.mxu0 0
      %1210 = vmatpush1.bf16.msra.mxu0 %v1197
      %1211 = vmatprep.subr.bf16.mxu0 0
      %1212 = vmatpush1.bf16.msra.mxu0 %v1198
      %1213 = vmatprep.subr.bf16.mxu0 0
      %1214 = vmatpush1.bf16.msra.mxu0 %v1199
      %1215 = vmatprep.subr.bf16.mxu0 0
      %1216 = vmatpush1.bf16.msra.mxu0 %v1200
      %1217 = vmatprep.subr.bf16.mxu0 0
      %1218 = vmatpush1.bf16.msra.mxu0 0
      %1219 = vmatprep.subr.bf16.mxu0 0
      %1220 = vmatpush1.bf16.msra.mxu0 0
      %1221 = vmatprep.subr.bf16.mxu0 0
      %1222 = vmatpush1.bf16.msra.mxu0 0
      %1223 = vmatprep.subr.bf16.mxu0 0
      %1224 = vmatpush1.bf16.msra.mxu0 0
      %1225 = vmatprep.subr.bf16.mxu0 0
      %1226 = vmatpush1.bf16.msra.mxu0 0
      %1227 = vmatprep.subr.bf16.mxu0 0
      %1228 = vmatpush1.bf16.msra.mxu0 0
      %1229 = vmatprep.subr.bf16.mxu0 0
      %1230 = vmatpush1.bf16.msra.mxu0 0
      %1231 = vmatprep.subr.bf16.mxu0 0
      %1232 = vmatpush1.bf16.msra.mxu0 0
      %1233 = vmatprep.subr.bf16.mxu0 0
      %1234 = vmatpush1.bf16.msra.mxu0 0
      %1235 = vmatprep.subr.bf16.mxu0 0
      %1236 = vmatpush1.bf16.msra.mxu0 0
      %1237 = vmatprep.subr.bf16.mxu0 0
      %1238 = vmatpush1.bf16.msra.mxu0 0
      %1239 = vmatprep.subr.bf16.mxu0 0
      %1240 = vmatpush1.bf16.msra.mxu0 0
      %1241 = vmatprep.mubr.bf16.mxu0 0
      %1242 = vmatmul.mubr.bf16.gmra.mrb[0].mxu0 %v1207
      %v1243 = vpop.f32.mrb[0].mxu0
      %v1244 = vadd.f32 %v1180, %v1243
      %v1245 = vpop.f32.mrb[0].mxu0
      %v1246 = vpop.f32.mrb[0].mxu0
      %v1247 = vpop.f32.mrb[0].mxu0
      %1248 = vdwg.mxu0
      %v1249 = vadd.f32 %v1069, %v1244
      %1250 = vst.msk [vmem:[#allocation2] sm:$0x1f] %vm448, %v1249
      %p1251 = scmp.eq.s32.totalorder %s24, 1
      // Predicated region
      $region57: #{clip_vision_tower_forward.3} parent=51 // pred_check
        %p1252 = pneg %p1251
      $region58: #{clip_vision_tower_forward.3} parent=51 // pred_check_branch
        %1254 = sbr.rel (%p1252) target = $region60
      $region59: #{clip_vision_tower_forward.3} parent=51 // pred_region
        %v1255 = vld [vmem:[#allocation2] sm:$0x1f]
        %1256 = vst.msk [vmem:[%s437] sm:$0x1f] %vm448, %v1255
      $region60: #{clip_vision_tower_forward.3} parent=51 // pred_fallthru
        _
      %p1257 = scmp.lt.s32.totalorder %s23, 1
      %s1258 = scalar_select %p1257, %s23, 1
      %s1259 = smul.addr %s1258, 8
      %s1260 = scalar_lea.vmem %s8, %s1259
      // Predicated region
      $region61: #{clip_vision_tower_forward.3} parent=51 // pred_check
        %p1261 = pneg %p257
      $region62: #{clip_vision_tower_forward.3} parent=51 // pred_check_branch
        %1263 = sbr.rel (%p1261) target = $region64
      $region63: #{clip_vision_tower_forward.3} parent=51 // pred_region
        _
      $region64: #{clip_vision_tower_forward.3} parent=51 // pred_fallthru
        _
    $region52: #{clip_vision_tower_forward.3} parent=5 // pred_fallthru
      _
    %p1264 = scmp.le.s32.totalorder 2, %s14
    // Predicated region
    $region65: #{clip_vision_tower_forward.3} parent=5 // pred_check
      %p1265 = pneg %p1264
    $region66: #{clip_vision_tower_forward.3} parent=5 // pred_check_branch
      %1267 = sbr.rel (%p1265) target = $region68
    $region67: #{clip_vision_tower_forward.3} parent=5 // pred_region
      %s1268 = ssub.s32 %s14, 2
      // Predicated region
      $region69: #{clip_vision_tower_forward.3} parent=67 // pred_check
        %p1269 = pneg %p263
      $region70: #{clip_vision_tower_forward.3} parent=67 // pred_check_branch
        %1271 = sbr.rel (%p1269) target = $region72
      $region71: #{clip_vision_tower_forward.3} parent=67 // pred_region
        %p1272 = scmp.lt.s32.totalorder %s25, 1
        %s1273 = scalar_select %p1272, %s25, 1
        %s1274 = smul.addr %s1273, 8
        %s1275 = scalar_lea.vmem %s8, %s1274
      $region72: #{clip_vision_tower_forward.3} parent=67 // pred_fallthru
        _
    $region68: #{clip_vision_tower_forward.3} parent=5 // pred_fallthru
      _
  $region6: #{clip_vision_tower_forward.3} parent=0 // loop_footer
    %s18 = sadd.s32 1, %s14
  $region7: #{clip_vision_tower_forward.3} parent=0 // loop_footer_branch
    %13 = sbr.rel target = $region3
  $region8: #{clip_vision_tower_forward.3} parent=0 // loop_exit
    _

</llo_original>
